<compile_context>
chip_gen: v7x
topology: tpu7x:2x2x1
jax: 0.10.0
libtpu: 0.0.40
codegen_flags: <defaults>
</compile_context>

<pallas_src>
import functools

import jax
import jax.numpy as jnp
from jax.experimental import pallas as pl
from jax.experimental.pallas import tpu as pltpu


def _layernorm(x, g, b, eps=1e-5):
    mu = jnp.mean(x, axis=-1, keepdims=True)
    var = jnp.mean((x - mu) ** 2, axis=-1, keepdims=True)
    return (x - mu) * jax.lax.rsqrt(var + eps) * g + b


# ---------------------------------------------------------------------------
# Fused kernel: MLPBase + AttModel (agent row only) + ACTLayer + argmax/logprob
# Grid: (B // TB,) over batch tiles ("parallel").
# ---------------------------------------------------------------------------
def _rdgn_fused_kernel(obs_ref, adj_ref,
                       fng_ref, fnb_ref,
                       w1_ref, b1_ref, g1_ref, be1_ref,
                       w2_ref, b2_ref, g2_ref, be2_ref,
                       wv_ref, bv_ref, wq_ref, bq_ref, wk_ref, bk_ref,
                       wa_ref, ba_ref,
                       act_ref, logp_ref,
                       *, agent_id, mm_dtype):
    TB, N, D = obs_ref.shape
    H = w1_ref.shape[1]

    def mm(a, b):
        # MXU matmul with f32 accumulation.  mm_dtype=bf16 uses the native MXU
        # path on v6e/v7x; elementwise math stays f32 (v5e has no bf16 VPU/EUP
        # and the 9e15 / 9e13 mask constants need f32 range).
        return jnp.dot(a.astype(mm_dtype), b.astype(mm_dtype),
                       preferred_element_type=jnp.float32)

    # ---- MLPBase on all TB*N agent rows at once (fills sublanes, one stream)
    x = obs_ref[...].reshape(TB * N, D)
    x = _layernorm(x, fng_ref[...], fnb_ref[...])                       # feature_norm
    h = jnp.maximum(mm(x, w1_ref[...]) + b1_ref[...], 0.0)
    h = _layernorm(h, g1_ref[...], be1_ref[...])
    h = jnp.maximum(mm(h, w2_ref[...]) + b2_ref[...], 0.0)
    feat = _layernorm(h, g2_ref[...], be2_ref[...])                     # (TB*N, H)

    # ---- AttModel (att_1): keys / values for all agents
    v = jnp.maximum(mm(feat, wv_ref[...]) + bv_ref[...], 0.0)           # (TB*N, H)
    k = jnp.maximum(mm(feat, wk_ref[...]) + bk_ref[...], 0.0)           # (TB*N, H)
    v3 = v.reshape(TB, N, H)
    k3 = k.reshape(TB, N, H)
    feat3 = feat.reshape(TB, N, H)

    # Query only for the agent_id row (only that row of the output is used).
    feat_a = feat3[:, agent_id, :]                                      # (TB, H)
    q = jnp.maximum(mm(feat_a, wq_ref[...]) + bq_ref[...], 0.0)         # (TB, H)
    q3 = q[:, None, :]                                                  # (TB, 1, H)

    s = jnp.einsum('bqh,bkh->bqk', q3.astype(mm_dtype), k3.astype(mm_dtype),
                   preferred_element_type=jnp.float32)                  # (TB, 1, N)
    m = adj_ref[...][:, agent_id:agent_id + 1, :]                       # (TB, 1, N)
    hm = jnp.clip(s * m, 0.0, 9.0e13) - 9.0e15 * (1.0 - m)              # masked scores
    hm = hm - jnp.max(hm, axis=-1, keepdims=True)
    e = jnp.exp(hm)
    att = e * pl.reciprocal(jnp.sum(e, axis=-1, keepdims=True), approx=True)
    att_out = jnp.einsum('bqk,bkh->bqh', att.astype(mm_dtype), v3.astype(mm_dtype),
                         preferred_element_type=jnp.float32)[:, 0, :]   # (TB, H)

    # ---- ACTLayer: concat([feat_a, att_out]) @ wa + ba, with the concat
    #      folded into two matmuls against the statically split weight.
    wa = wa_ref[...]                                                    # (2H, A)
    logits = mm(feat_a, wa[:H, :]) + mm(att_out, wa[H:, :]) + ba_ref[...]  # (TB, A)

    # ---- deterministic action (Categorical mode) and its log-probability
    max_logit = jnp.max(logits, axis=-1, keepdims=True)                 # (TB, 1)
    colf = jax.lax.broadcasted_iota(jnp.int32, logits.shape, 1).astype(jnp.float32)
    neg_idx = jnp.where(logits >= max_logit, -colf, -float(logits.shape[-1]))
    action = (-jnp.max(neg_idx, axis=-1, keepdims=True)).astype(jnp.int32)  # first argmax
    lse = max_logit + jnp.log(jnp.sum(jnp.exp(logits - max_logit),
                                      axis=-1, keepdims=True))

    act_ref[...] = action                                               # (TB, 1) int32
    logp_ref[...] = max_logit - lse                                     # (TB, 1) f32


def rdgn_actor_pallas(params, obs, adj_matrix, agent_id, *,
                      batch_tile=None, mm_dtype=jnp.float32):
    B, N, D = obs.shape
    TB = batch_tile if batch_tile is not None else min(B, 8)
    assert B % TB == 0, "batch must be a multiple of the batch tile"

    base, att, actp = params["base"], params["att_1"], params["act"]
    weights = (base["fn_g"], base["fn_b"],
               base["w1"], base["b1"], base["ln1_g"], base["ln1_b"],
               base["w2"], base["b2"], base["ln2_g"], base["ln2_b"],
               att["wv"], att["bv"], att["wq"], att["bq"], att["wk"], att["bk"],
               actp["w"], actp["b"])

    def const_spec(a):          # full array resident in VMEM, same block each step
        nd = a.ndim
        return pl.BlockSpec(a.shape, lambda i, _nd=nd: (0,) * _nd)

    kernel = functools.partial(_rdgn_fused_kernel,
                               agent_id=int(agent_id), mm_dtype=mm_dtype)

    actions, logp = pl.pallas_call(
        kernel,
        grid=(B // TB,),
        in_specs=[pl.BlockSpec((TB, N, D), lambda i: (i, 0, 0)),   # obs   per batch tile
                  pl.BlockSpec((TB, N, N), lambda i: (i, 0, 0))]   # adj   per batch tile
                 + [const_spec(w) for w in weights],
        out_specs=(pl.BlockSpec((TB, 1), lambda i: (i, 0)),
                   pl.BlockSpec((TB, 1), lambda i: (i, 0))),
        out_shape=(jax.ShapeDtypeStruct((B, 1), jnp.int32),
                   jax.ShapeDtypeStruct((B, 1), jnp.float32)),
        compiler_params=pltpu.CompilerParams(
            dimension_semantics=("parallel",)),   # batch tiles shard across v7x's 2 TCs
    )(obs, adj_matrix, *weights)
    return actions, logp


# ---------------------------------------------------------------------------
# Full RDGN_Actor.forward
# ---------------------------------------------------------------------------
def rdgn_actor_forward(params, obs, rnn_states, masks, adj_matrix,
                       agent_id=0, deterministic=True):
    # use_recurrent_policy=False config: RNN skipped, masks unused.
    # TODO(synk): RNNLayer (GRU) path not implemented (config skips it in torch too).
    # TODO(synk): deterministic=False (Categorical.sample) not implemented; mode returned.
    del masks, deterministic
    actions, action_log_probs = rdgn_actor_pallas(params, obs, adj_matrix, agent_id)
    return actions, action_log_probs, rnn_states


if __name__ == "__main__":
    key = jax.random.PRNGKey(0)
    B, N, D_obs, H, A = 2, 8, 16, 64, 5      # batch, num_agents, obs_dim, hidden, actions
    keys = jax.random.split(key, 16)

    def w(k, shape, scale=0.1):
        return scale * jax.random.normal(k, shape, jnp.float32)

    params = {
        "base": {
            "fn_g": jnp.ones((1, D_obs), jnp.float32),
            "fn_b": jnp.zeros((1, D_obs), jnp.float32),
            "w1": w(keys[0], (D_obs, H)), "b1": jnp.zeros((1, H), jnp.float32),
            "ln1_g": jnp.ones((1, H), jnp.float32), "ln1_b": jnp.zeros((1, H), jnp.float32),
            "w2": w(keys[1], (H, H)), "b2": jnp.zeros((1, H), jnp.float32),
            "ln2_g": jnp.ones((1, H), jnp.float32), "ln2_b": jnp.zeros((1, H), jnp.float32),
        },
        "att_1": {
            "wv": w(keys[2], (H, H)), "bv": w(keys[3], (1, H), 0.01),
            "wq": w(keys[4], (H, H)), "bq": w(keys[5], (1, H), 0.01),
            "wk": w(keys[6], (H, H)), "bk": w(keys[7], (1, H), 0.01),
        },
        "act": {"w": w(keys[8], (2 * H, A)), "b": jnp.zeros((1, A), jnp.float32)},
    }

    obs = jax.random.normal(keys[10], (B, N, D_obs), jnp.float32)
    rnn_states = jnp.zeros((B, N, 1, H), jnp.float32)
    masks = jnp.ones((B, N, 1), jnp.float32)
    adj = (jax.random.uniform(keys[11], (B, N, N)) > 0.5).astype(jnp.float32)
    adj = jnp.maximum(adj, jnp.eye(N, dtype=jnp.float32)[None])   # self-edges

    fwd = jax.jit(functools.partial(rdgn_actor_forward, agent_id=1, deterministic=True))
    actions, action_log_probs, rnn_out = fwd(params, obs, rnn_states, masks, adj)
    jax.block_until_ready((actions, action_log_probs, rnn_out))
    assert actions.shape == (B, 1) and actions.dtype == jnp.int32
    assert action_log_probs.shape == (B, 1)
    assert rnn_out.shape == rnn_states.shape
    print("KERNEL_OK")
</pallas_src>

<mosaic_0001>
module attributes {stable_mosaic.version = 11 : i64} {
  func.func @_rdgn_fused_kernel(%arg0: i32, %arg1: memref<2x8x16xf32, #tpu.memory_space<vmem>>, %arg2: memref<2x8x8xf32, #tpu.memory_space<vmem>>, %arg3: memref<1x16xf32, #tpu.memory_space<vmem>>, %arg4: memref<1x16xf32, #tpu.memory_space<vmem>>, %arg5: memref<16x64xf32, #tpu.memory_space<vmem>>, %arg6: memref<1x64xf32, #tpu.memory_space<vmem>>, %arg7: memref<1x64xf32, #tpu.memory_space<vmem>>, %arg8: memref<1x64xf32, #tpu.memory_space<vmem>>, %arg9: memref<64x64xf32, #tpu.memory_space<vmem>>, %arg10: memref<1x64xf32, #tpu.memory_space<vmem>>, %arg11: memref<1x64xf32, #tpu.memory_space<vmem>>, %arg12: memref<1x64xf32, #tpu.memory_space<vmem>>, %arg13: memref<64x64xf32, #tpu.memory_space<vmem>>, %arg14: memref<1x64xf32, #tpu.memory_space<vmem>>, %arg15: memref<64x64xf32, #tpu.memory_space<vmem>>, %arg16: memref<1x64xf32, #tpu.memory_space<vmem>>, %arg17: memref<64x64xf32, #tpu.memory_space<vmem>>, %arg18: memref<1x64xf32, #tpu.memory_space<vmem>>, %arg19: memref<128x5xf32, #tpu.memory_space<vmem>>, %arg20: memref<1x5xf32, #tpu.memory_space<vmem>>, %arg21: memref<2x1xi32, #tpu.memory_space<vmem>>, %arg22: memref<2x1xf32, #tpu.memory_space<vmem>>) attributes {dimension_semantics = [#tpu.dimension_semantics<parallel>], iteration_bounds = array<i64: 1>, scalar_prefetch = 0 : i64, scratch_operands = 0 : i64, tpu.core_type = #tpu.core_type<tc>, window_params = [{transform_indices = @transform_0, window_bounds = array<i64: 2, 8, 16>}, {transform_indices = @transform_1, window_bounds = array<i64: 2, 8, 8>}, {pipeline_mode = #tpu.pipeline_mode<synchronous>, transform_indices = @transform_2, window_bounds = array<i64: 1, 16>}, {pipeline_mode = #tpu.pipeline_mode<synchronous>, transform_indices = @transform_3, window_bounds = array<i64: 1, 16>}, {pipeline_mode = #tpu.pipeline_mode<synchronous>, transform_indices = @transform_4, window_bounds = array<i64: 16, 64>}, {pipeline_mode = #tpu.pipeline_mode<synchronous>, transform_indices = @transform_5, window_bounds = array<i64: 1, 64>}, {pipeline_mode = #tpu.pipeline_mode<synchronous>, transform_indices = @transform_6, window_bounds = array<i64: 1, 64>}, {pipeline_mode = #tpu.pipeline_mode<synchronous>, transform_indices = @transform_7, window_bounds = array<i64: 1, 64>}, {pipeline_mode = #tpu.pipeline_mode<synchronous>, transform_indices = @transform_8, window_bounds = array<i64: 64, 64>}, {pipeline_mode = #tpu.pipeline_mode<synchronous>, transform_indices = @transform_9, window_bounds = array<i64: 1, 64>}, {pipeline_mode = #tpu.pipeline_mode<synchronous>, transform_indices = @transform_10, window_bounds = array<i64: 1, 64>}, {pipeline_mode = #tpu.pipeline_mode<synchronous>, transform_indices = @transform_11, window_bounds = array<i64: 1, 64>}, {pipeline_mode = #tpu.pipeline_mode<synchronous>, transform_indices = @transform_12, window_bounds = array<i64: 64, 64>}, {pipeline_mode = #tpu.pipeline_mode<synchronous>, transform_indices = @transform_13, window_bounds = array<i64: 1, 64>}, {pipeline_mode = #tpu.pipeline_mode<synchronous>, transform_indices = @transform_14, window_bounds = array<i64: 64, 64>}, {pipeline_mode = #tpu.pipeline_mode<synchronous>, transform_indices = @transform_15, window_bounds = array<i64: 1, 64>}, {pipeline_mode = #tpu.pipeline_mode<synchronous>, transform_indices = @transform_16, window_bounds = array<i64: 64, 64>}, {pipeline_mode = #tpu.pipeline_mode<synchronous>, transform_indices = @transform_17, window_bounds = array<i64: 1, 64>}, {pipeline_mode = #tpu.pipeline_mode<synchronous>, transform_indices = @transform_18, window_bounds = array<i64: 128, 5>}, {pipeline_mode = #tpu.pipeline_mode<synchronous>, transform_indices = @transform_19, window_bounds = array<i64: 1, 5>}, {transform_indices = @transform_20, window_bounds = array<i64: 2, 1>}, {transform_indices = @transform_21, window_bounds = array<i64: 2, 1>}]} {
    %c0 = arith.constant 0 : index
    %c0_0 = arith.constant 0 : index
    %c0_1 = arith.constant 0 : index
    %0 = vector.load %arg1[%c0, %c0_0, %c0_1] : memref<2x8x16xf32, #tpu.memory_space<vmem>>, vector<2x8x16xf32>
    %1 = vector.shape_cast %0 : vector<2x8x16xf32> to vector<16x16xf32>
    %c0_2 = arith.constant 0 : index
    %c0_3 = arith.constant 0 : index
    %2 = vector.load %arg3[%c0_2, %c0_3] : memref<1x16xf32, #tpu.memory_space<vmem>>, vector<1x16xf32>
    %c0_4 = arith.constant 0 : index
    %c0_5 = arith.constant 0 : index
    %3 = vector.load %arg4[%c0_4, %c0_5] : memref<1x16xf32, #tpu.memory_space<vmem>>, vector<1x16xf32>
    %cst = arith.constant dense<0.000000e+00> : vector<16xf32>
    %4 = vector.multi_reduction <add>, %1, %cst [1] : vector<16x16xf32> to vector<16xf32>
    %5 = vector.shape_cast %4 : vector<16xf32> to vector<16x1xf32>
    %cst_6 = arith.constant 1.600000e+01 : f32
    %6 = vector.broadcast %cst_6 : f32 to vector<16x1xf32>
    %7 = arith.divf %5, %6 : vector<16x1xf32>
    %8 = vector.broadcast %7 : vector<16x1xf32> to vector<16x16xf32>
    %9 = arith.subf %1, %8 : vector<16x16xf32>
    %10 = arith.mulf %9, %9 : vector<16x16xf32>
    %cst_7 = arith.constant dense<0.000000e+00> : vector<16xf32>
    %11 = vector.multi_reduction <add>, %10, %cst_7 [1] : vector<16x16xf32> to vector<16xf32>
    %12 = vector.shape_cast %11 : vector<16xf32> to vector<16x1xf32>
    %cst_8 = arith.constant 1.600000e+01 : f32
    %13 = vector.broadcast %cst_8 : f32 to vector<16x1xf32>
    %14 = arith.divf %12, %13 : vector<16x1xf32>
    %15 = vector.broadcast %7 : vector<16x1xf32> to vector<16x16xf32>
    %16 = arith.subf %1, %15 : vector<16x16xf32>
    %cst_9 = arith.constant 9.99999974E-6 : f32
    %17 = vector.broadcast %cst_9 : f32 to vector<16x1xf32>
    %18 = arith.addf %14, %17 : vector<16x1xf32>
    %19 = math.rsqrt %18 : vector<16x1xf32>
    %20 = vector.broadcast %19 : vector<16x1xf32> to vector<16x16xf32>
    %21 = arith.mulf %16, %20 : vector<16x16xf32>
    %22 = vector.broadcast %2 : vector<1x16xf32> to vector<16x16xf32>
    %23 = arith.mulf %21, %22 : vector<16x16xf32>
    %24 = vector.broadcast %3 : vector<1x16xf32> to vector<16x16xf32>
    %25 = arith.addf %23, %24 : vector<16x16xf32>
    %c0_10 = arith.constant 0 : index
    %c0_11 = arith.constant 0 : index
    %26 = vector.load %arg5[%c0_10, %c0_11] : memref<16x64xf32, #tpu.memory_space<vmem>>, vector<16x64xf32>
    %cst_12 = arith.constant dense<0.000000e+00> : vector<16x64xf32>
    %27 = tpu.matmul %25, %26, %cst_12 {dimension_numbers = #tpu.dot_dimension_numbers<[1], [0], [0], [1], [0, 0, 1, 1], [], []>} : vector<16x16xf32>, vector<16x64xf32>, vector<16x64xf32> -> vector<16x64xf32>
    %c0_13 = arith.constant 0 : index
    %c0_14 = arith.constant 0 : index
    %28 = vector.load %arg6[%c0_13, %c0_14] : memref<1x64xf32, #tpu.memory_space<vmem>>, vector<1x64xf32>
    %29 = vector.broadcast %28 : vector<1x64xf32> to vector<16x64xf32>
    %30 = arith.addf %27, %29 : vector<16x64xf32>
    %cst_15 = arith.constant 0.000000e+00 : f32
    %31 = vector.broadcast %cst_15 : f32 to vector<16x64xf32>
    %32 = arith.maximumf %30, %31 : vector<16x64xf32>
    %c0_16 = arith.constant 0 : index
    %c0_17 = arith.constant 0 : index
    %33 = vector.load %arg7[%c0_16, %c0_17] : memref<1x64xf32, #tpu.memory_space<vmem>>, vector<1x64xf32>
    %c0_18 = arith.constant 0 : index
    %c0_19 = arith.constant 0 : index
    %34 = vector.load %arg8[%c0_18, %c0_19] : memref<1x64xf32, #tpu.memory_space<vmem>>, vector<1x64xf32>
    %cst_20 = arith.constant dense<0.000000e+00> : vector<16xf32>
    %35 = vector.multi_reduction <add>, %32, %cst_20 [1] : vector<16x64xf32> to vector<16xf32>
    %36 = vector.shape_cast %35 : vector<16xf32> to vector<16x1xf32>
    %cst_21 = arith.constant 6.400000e+01 : f32
    %37 = vector.broadcast %cst_21 : f32 to vector<16x1xf32>
    %38 = arith.divf %36, %37 : vector<16x1xf32>
    %39 = vector.broadcast %38 : vector<16x1xf32> to vector<16x64xf32>
    %40 = arith.subf %32, %39 : vector<16x64xf32>
    %41 = arith.mulf %40, %40 : vector<16x64xf32>
    %cst_22 = arith.constant dense<0.000000e+00> : vector<16xf32>
    %42 = vector.multi_reduction <add>, %41, %cst_22 [1] : vector<16x64xf32> to vector<16xf32>
    %43 = vector.shape_cast %42 : vector<16xf32> to vector<16x1xf32>
    %cst_23 = arith.constant 6.400000e+01 : f32
    %44 = vector.broadcast %cst_23 : f32 to vector<16x1xf32>
    %45 = arith.divf %43, %44 : vector<16x1xf32>
    %46 = vector.broadcast %38 : vector<16x1xf32> to vector<16x64xf32>
    %47 = arith.subf %32, %46 : vector<16x64xf32>
    %cst_24 = arith.constant 9.99999974E-6 : f32
    %48 = vector.broadcast %cst_24 : f32 to vector<16x1xf32>
    %49 = arith.addf %45, %48 : vector<16x1xf32>
    %50 = math.rsqrt %49 : vector<16x1xf32>
    %51 = vector.broadcast %50 : vector<16x1xf32> to vector<16x64xf32>
    %52 = arith.mulf %47, %51 : vector<16x64xf32>
    %53 = vector.broadcast %33 : vector<1x64xf32> to vector<16x64xf32>
    %54 = arith.mulf %52, %53 : vector<16x64xf32>
    %55 = vector.broadcast %34 : vector<1x64xf32> to vector<16x64xf32>
    %56 = arith.addf %54, %55 : vector<16x64xf32>
    %c0_25 = arith.constant 0 : index
    %c0_26 = arith.constant 0 : index
    %57 = vector.load %arg9[%c0_25, %c0_26] : memref<64x64xf32, #tpu.memory_space<vmem>>, vector<64x64xf32>
    %cst_27 = arith.constant dense<0.000000e+00> : vector<16x64xf32>
    %58 = tpu.matmul %56, %57, %cst_27 {dimension_numbers = #tpu.dot_dimension_numbers<[1], [0], [0], [1], [0, 0, 1, 1], [], []>} : vector<16x64xf32>, vector<64x64xf32>, vector<16x64xf32> -> vector<16x64xf32>
    %c0_28 = arith.constant 0 : index
    %c0_29 = arith.constant 0 : index
    %59 = vector.load %arg10[%c0_28, %c0_29] : memref<1x64xf32, #tpu.memory_space<vmem>>, vector<1x64xf32>
    %60 = vector.broadcast %59 : vector<1x64xf32> to vector<16x64xf32>
    %61 = arith.addf %58, %60 : vector<16x64xf32>
    %cst_30 = arith.constant 0.000000e+00 : f32
    %62 = vector.broadcast %cst_30 : f32 to vector<16x64xf32>
    %63 = arith.maximumf %61, %62 : vector<16x64xf32>
    %c0_31 = arith.constant 0 : index
    %c0_32 = arith.constant 0 : index
    %64 = vector.load %arg11[%c0_31, %c0_32] : memref<1x64xf32, #tpu.memory_space<vmem>>, vector<1x64xf32>
    %c0_33 = arith.constant 0 : index
    %c0_34 = arith.constant 0 : index
    %65 = vector.load %arg12[%c0_33, %c0_34] : memref<1x64xf32, #tpu.memory_space<vmem>>, vector<1x64xf32>
    %cst_35 = arith.constant dense<0.000000e+00> : vector<16xf32>
    %66 = vector.multi_reduction <add>, %63, %cst_35 [1] : vector<16x64xf32> to vector<16xf32>
    %67 = vector.shape_cast %66 : vector<16xf32> to vector<16x1xf32>
    %cst_36 = arith.constant 6.400000e+01 : f32
    %68 = vector.broadcast %cst_36 : f32 to vector<16x1xf32>
    %69 = arith.divf %67, %68 : vector<16x1xf32>
    %70 = vector.broadcast %69 : vector<16x1xf32> to vector<16x64xf32>
    %71 = arith.subf %63, %70 : vector<16x64xf32>
    %72 = arith.mulf %71, %71 : vector<16x64xf32>
    %cst_37 = arith.constant dense<0.000000e+00> : vector<16xf32>
    %73 = vector.multi_reduction <add>, %72, %cst_37 [1] : vector<16x64xf32> to vector<16xf32>
    %74 = vector.shape_cast %73 : vector<16xf32> to vector<16x1xf32>
    %cst_38 = arith.constant 6.400000e+01 : f32
    %75 = vector.broadcast %cst_38 : f32 to vector<16x1xf32>
    %76 = arith.divf %74, %75 : vector<16x1xf32>
    %77 = vector.broadcast %69 : vector<16x1xf32> to vector<16x64xf32>
    %78 = arith.subf %63, %77 : vector<16x64xf32>
    %cst_39 = arith.constant 9.99999974E-6 : f32
    %79 = vector.broadcast %cst_39 : f32 to vector<16x1xf32>
    %80 = arith.addf %76, %79 : vector<16x1xf32>
    %81 = math.rsqrt %80 : vector<16x1xf32>
    %82 = vector.broadcast %81 : vector<16x1xf32> to vector<16x64xf32>
    %83 = arith.mulf %78, %82 : vector<16x64xf32>
    %84 = vector.broadcast %64 : vector<1x64xf32> to vector<16x64xf32>
    %85 = arith.mulf %83, %84 : vector<16x64xf32>
    %86 = vector.broadcast %65 : vector<1x64xf32> to vector<16x64xf32>
    %87 = arith.addf %85, %86 : vector<16x64xf32>
    %c0_40 = arith.constant 0 : index
    %c0_41 = arith.constant 0 : index
    %88 = vector.load %arg13[%c0_40, %c0_41] : memref<64x64xf32, #tpu.memory_space<vmem>>, vector<64x64xf32>
    %cst_42 = arith.constant dense<0.000000e+00> : vector<16x64xf32>
    %89 = tpu.matmul %87, %88, %cst_42 {dimension_numbers = #tpu.dot_dimension_numbers<[1], [0], [0], [1], [0, 0, 1, 1], [], []>} : vector<16x64xf32>, vector<64x64xf32>, vector<16x64xf32> -> vector<16x64xf32>
    %c0_43 = arith.constant 0 : index
    %c0_44 = arith.constant 0 : index
    %90 = vector.load %arg14[%c0_43, %c0_44] : memref<1x64xf32, #tpu.memory_space<vmem>>, vector<1x64xf32>
    %91 = vector.broadcast %90 : vector<1x64xf32> to vector<16x64xf32>
    %92 = arith.addf %89, %91 : vector<16x64xf32>
    %cst_45 = arith.constant 0.000000e+00 : f32
    %93 = vector.broadcast %cst_45 : f32 to vector<16x64xf32>
    %94 = arith.maximumf %92, %93 : vector<16x64xf32>
    %c0_46 = arith.constant 0 : index
    %c0_47 = arith.constant 0 : index
    %95 = vector.load %arg17[%c0_46, %c0_47] : memref<64x64xf32, #tpu.memory_space<vmem>>, vector<64x64xf32>
    %cst_48 = arith.constant dense<0.000000e+00> : vector<16x64xf32>
    %96 = tpu.matmul %87, %95, %cst_48 {dimension_numbers = #tpu.dot_dimension_numbers<[1], [0], [0], [1], [0, 0, 1, 1], [], []>} : vector<16x64xf32>, vector<64x64xf32>, vector<16x64xf32> -> vector<16x64xf32>
    %c0_49 = arith.constant 0 : index
    %c0_50 = arith.constant 0 : index
    %97 = vector.load %arg18[%c0_49, %c0_50] : memref<1x64xf32, #tpu.memory_space<vmem>>, vector<1x64xf32>
    %98 = vector.broadcast %97 : vector<1x64xf32> to vector<16x64xf32>
    %99 = arith.addf %96, %98 : vector<16x64xf32>
    %cst_51 = arith.constant 0.000000e+00 : f32
    %100 = vector.broadcast %cst_51 : f32 to vector<16x64xf32>
    %101 = arith.maximumf %99, %100 : vector<16x64xf32>
    %102 = vector.shape_cast %94 : vector<16x64xf32> to vector<2x8x64xf32>
    %103 = vector.shape_cast %101 : vector<16x64xf32> to vector<2x8x64xf32>
    %104 = vector.shape_cast %87 : vector<16x64xf32> to vector<2x8x64xf32>
    %105 = vector.extract_strided_slice %104 {offsets = [0, 1, 0], sizes = [2, 1, 64], strides = [1, 1, 1]} : vector<2x8x64xf32> to vector<2x1x64xf32>
    %106 = vector.shape_cast %105 : vector<2x1x64xf32> to vector<2x64xf32>
    %c0_52 = arith.constant 0 : index
    %c0_53 = arith.constant 0 : index
    %107 = vector.load %arg15[%c0_52, %c0_53] : memref<64x64xf32, #tpu.memory_space<vmem>>, vector<64x64xf32>
    %cst_54 = arith.constant dense<0.000000e+00> : vector<2x64xf32>
    %108 = tpu.matmul %106, %107, %cst_54 {dimension_numbers = #tpu.dot_dimension_numbers<[1], [0], [0], [1], [0, 0, 1, 1], [], []>} : vector<2x64xf32>, vector<64x64xf32>, vector<2x64xf32> -> vector<2x64xf32>
    %c0_55 = arith.constant 0 : index
    %c0_56 = arith.constant 0 : index
    %109 = vector.load %arg16[%c0_55, %c0_56] : memref<1x64xf32, #tpu.memory_space<vmem>>, vector<1x64xf32>
    %110 = vector.broadcast %109 : vector<1x64xf32> to vector<2x64xf32>
    %111 = arith.addf %108, %110 : vector<2x64xf32>
    %cst_57 = arith.constant 0.000000e+00 : f32
    %112 = vector.broadcast %cst_57 : f32 to vector<2x64xf32>
    %113 = arith.maximumf %111, %112 : vector<2x64xf32>
    %114 = vector.shape_cast %113 : vector<2x64xf32> to vector<2x1x64xf32>
    "tpu.trace_start"() <{level = 10 : i32, message = "bqh,bkh->bqk"}> : () -> ()
    %cst_58 = arith.constant dense<0.000000e+00> : vector<2x1x8xf32>
    %115 = tpu.matmul %114, %103, %cst_58 {dimension_numbers = #tpu.dot_dimension_numbers<[2], [2], [1], [1], [0, 0, 0, 1, 1, 1], [0], [0]>} : vector<2x1x64xf32>, vector<2x8x64xf32>, vector<2x1x8xf32> -> vector<2x1x8xf32>
    "tpu.trace_stop"() : () -> ()
    %c0_59 = arith.constant 0 : index
    %c0_60 = arith.constant 0 : index
    %c0_61 = arith.constant 0 : index
    %116 = vector.load %arg2[%c0_59, %c0_60, %c0_61] : memref<2x8x8xf32, #tpu.memory_space<vmem>>, vector<2x8x8xf32>
    %117 = vector.extract_strided_slice %116 {offsets = [0, 1, 0], sizes = [2, 1, 8], strides = [1, 1, 1]} : vector<2x8x8xf32> to vector<2x1x8xf32>
    %118 = arith.mulf %115, %117 : vector<2x1x8xf32>
    %cst_62 = arith.constant 0.000000e+00 : f32
    %cst_63 = arith.constant 8.99999995E+13 : f32
    %119 = vector.broadcast %cst_62 : f32 to vector<2x1x8xf32>
    %120 = arith.maximumf %119, %118 : vector<2x1x8xf32>
    %121 = vector.broadcast %cst_63 : f32 to vector<2x1x8xf32>
    %122 = arith.minimumf %121, %120 : vector<2x1x8xf32>
    %cst_64 = arith.constant 1.000000e+00 : f32
    %123 = vector.broadcast %cst_64 : f32 to vector<2x1x8xf32>
    %124 = arith.subf %123, %117 : vector<2x1x8xf32>
    %cst_65 = arith.constant 9.000000e+15 : f32
    %125 = vector.broadcast %cst_65 : f32 to vector<2x1x8xf32>
    %126 = arith.mulf %125, %124 : vector<2x1x8xf32>
    %127 = arith.subf %122, %126 : vector<2x1x8xf32>
    %cst_66 = arith.constant dense<0xFF800000> : vector<2x1xf32>
    %128 = vector.multi_reduction <maximumf>, %127, %cst_66 [2] : vector<2x1x8xf32> to vector<2x1xf32>
    %129 = vector.shape_cast %128 : vector<2x1xf32> to vector<2x1x1xf32>
    %130 = vector.broadcast %129 : vector<2x1x1xf32> to vector<2x1x8xf32>
    %131 = arith.subf %127, %130 : vector<2x1x8xf32>
    %132 = math.exp %131 : vector<2x1x8xf32>
    %cst_67 = arith.constant dense<0.000000e+00> : vector<2x1xf32>
    %133 = vector.multi_reduction <add>, %132, %cst_67 [2] : vector<2x1x8xf32> to vector<2x1xf32>
    %134 = vector.shape_cast %133 : vector<2x1xf32> to vector<2x1x1xf32>
    %135 = tpu.reciprocal %134 {approx = true} : vector<2x1x1xf32> -> vector<2x1x1xf32>
    %136 = vector.broadcast %135 : vector<2x1x1xf32> to vector<2x1x8xf32>
    %137 = arith.mulf %132, %136 : vector<2x1x8xf32>
    "tpu.trace_start"() <{level = 10 : i32, message = "bqk,bkh->bqh"}> : () -> ()
    %cst_68 = arith.constant dense<0.000000e+00> : vector<2x1x64xf32>
    %138 = tpu.matmul %137, %102, %cst_68 {dimension_numbers = #tpu.dot_dimension_numbers<[2], [1], [1], [2], [0, 0, 0, 1, 1, 2], [0], [0]>} : vector<2x1x8xf32>, vector<2x8x64xf32>, vector<2x1x64xf32> -> vector<2x1x64xf32>
    "tpu.trace_stop"() : () -> ()
    %139 = vector.shape_cast %138 : vector<2x1x64xf32> to vector<2x64xf32>
    %c0_69 = arith.constant 0 : index
    %c0_70 = arith.constant 0 : index
    %140 = vector.load %arg19[%c0_69, %c0_70] : memref<128x5xf32, #tpu.memory_space<vmem>>, vector<128x5xf32>
    %141 = vector.extract_strided_slice %140 {offsets = [0, 0], sizes = [64, 5], strides = [1, 1]} : vector<128x5xf32> to vector<64x5xf32>
    %cst_71 = arith.constant dense<0.000000e+00> : vector<2x5xf32>
    %142 = tpu.matmul %106, %141, %cst_71 {dimension_numbers = #tpu.dot_dimension_numbers<[1], [0], [0], [1], [0, 0, 1, 1], [], []>} : vector<2x64xf32>, vector<64x5xf32>, vector<2x5xf32> -> vector<2x5xf32>
    %143 = vector.extract_strided_slice %140 {offsets = [64, 0], sizes = [64, 5], strides = [1, 1]} : vector<128x5xf32> to vector<64x5xf32>
    %cst_72 = arith.constant dense<0.000000e+00> : vector<2x5xf32>
    %144 = tpu.matmul %139, %143, %cst_72 {dimension_numbers = #tpu.dot_dimension_numbers<[1], [0], [0], [1], [0, 0, 1, 1], [], []>} : vector<2x64xf32>, vector<64x5xf32>, vector<2x5xf32> -> vector<2x5xf32>
    %145 = arith.addf %142, %144 : vector<2x5xf32>
    %c0_73 = arith.constant 0 : index
    %c0_74 = arith.constant 0 : index
    %146 = vector.load %arg20[%c0_73, %c0_74] : memref<1x5xf32, #tpu.memory_space<vmem>>, vector<1x5xf32>
    %147 = vector.broadcast %146 : vector<1x5xf32> to vector<2x5xf32>
    %148 = arith.addf %145, %147 : vector<2x5xf32>
    %cst_75 = arith.constant dense<0xFF800000> : vector<2xf32>
    %149 = vector.multi_reduction <maximumf>, %148, %cst_75 [1] : vector<2x5xf32> to vector<2xf32>
    %150 = vector.shape_cast %149 : vector<2xf32> to vector<2x1xf32>
    %151 = tpu.iota {dimensions = array<i32: 1>} : vector<2x5xi32>
    %152 = arith.sitofp %151 : vector<2x5xi32> to vector<2x5xf32>
    %153 = vector.broadcast %150 : vector<2x1xf32> to vector<2x5xf32>
    %154 = arith.cmpf oge, %148, %153 : vector<2x5xf32>
    %cst_76 = arith.constant 0.000000e+00 : f32
    %155 = vector.broadcast %cst_76 : f32 to vector<2x5xf32>
    %156 = arith.subf %155, %152 : vector<2x5xf32>
    %cst_77 = arith.constant -5.000000e+00 : f32
    %157 = vector.broadcast %cst_77 : f32 to vector<2x5xf32>
    %158 = arith.select %154, %156, %157 : vector<2x5xi1>, vector<2x5xf32>
    %cst_78 = arith.constant dense<0xFF800000> : vector<2xf32>
    %159 = vector.multi_reduction <maximumf>, %158, %cst_78 [1] : vector<2x5xf32> to vector<2xf32>
    %160 = vector.shape_cast %159 : vector<2xf32> to vector<2x1xf32>
    %cst_79 = arith.constant 0.000000e+00 : f32
    %161 = vector.broadcast %cst_79 : f32 to vector<2x1xf32>
    %162 = arith.subf %161, %160 : vector<2x1xf32>
    %163 = arith.fptosi %162 : vector<2x1xf32> to vector<2x1xi32>
    %164 = vector.broadcast %150 : vector<2x1xf32> to vector<2x5xf32>
    %165 = arith.subf %148, %164 : vector<2x5xf32>
    %166 = math.exp %165 : vector<2x5xf32>
    %cst_80 = arith.constant dense<0.000000e+00> : vector<2xf32>
    %167 = vector.multi_reduction <add>, %166, %cst_80 [1] : vector<2x5xf32> to vector<2xf32>
    %168 = vector.shape_cast %167 : vector<2xf32> to vector<2x1xf32>
    %169 = math.log %168 : vector<2x1xf32>
    %170 = arith.addf %150, %169 : vector<2x1xf32>
    %c0_81 = arith.constant 0 : index
    %c0_82 = arith.constant 0 : index
    %171 = vector.load %arg21[%c0_81, %c0_82] : memref<2x1xi32, #tpu.memory_space<vmem>>, vector<2x1xi32>
    tpu.vector_store %arg21[%c0_81, %c0_82], %163 {strides = array<i32>} : memref<2x1xi32, #tpu.memory_space<vmem>>, vector<2x1xi32>,
    %172 = arith.subf %150, %170 : vector<2x1xf32>
    %c0_83 = arith.constant 0 : index
    %c0_84 = arith.constant 0 : index
    %173 = vector.load %arg22[%c0_83, %c0_84] : memref<2x1xf32, #tpu.memory_space<vmem>>, vector<2x1xf32>
    tpu.vector_store %arg22[%c0_83, %c0_84], %172 {strides = array<i32>} : memref<2x1xf32, #tpu.memory_space<vmem>>, vector<2x1xf32>,
    return
  }
  func.func @transform_0(%arg0: i32) -> (i32, i32, i32) {
    %c0_i32 = arith.constant 0 : i32
    %c0_i32_0 = arith.constant 0 : i32
    %c0_i32_1 = arith.constant 0 : i32
    return %arg0, %c0_i32, %c0_i32_0 : i32, i32, i32
  }
  func.func @transform_1(%arg0: i32) -> (i32, i32, i32) {
    %c0_i32 = arith.constant 0 : i32
    %c0_i32_0 = arith.constant 0 : i32
    %c0_i32_1 = arith.constant 0 : i32
    return %arg0, %c0_i32, %c0_i32_0 : i32, i32, i32
  }
  func.func @transform_2(%arg0: i32) -> (i32, i32) {
    %c0_i32 = arith.constant 0 : i32
    %c0_i32_0 = arith.constant 0 : i32
    %c0_i32_1 = arith.constant 0 : i32
    return %c0_i32, %c0_i32_0 : i32, i32
  }
  func.func @transform_3(%arg0: i32) -> (i32, i32) {
    %c0_i32 = arith.constant 0 : i32
    %c0_i32_0 = arith.constant 0 : i32
    %c0_i32_1 = arith.constant 0 : i32
    return %c0_i32, %c0_i32_0 : i32, i32
  }
  func.func @transform_4(%arg0: i32) -> (i32, i32) {
    %c0_i32 = arith.constant 0 : i32
    %c0_i32_0 = arith.constant 0 : i32
    %c0_i32_1 = arith.constant 0 : i32
    return %c0_i32, %c0_i32_0 : i32, i32
  }
  func.func @transform_5(%arg0: i32) -> (i32, i32) {
    %c0_i32 = arith.constant 0 : i32
    %c0_i32_0 = arith.constant 0 : i32
    %c0_i32_1 = arith.constant 0 : i32
    return %c0_i32, %c0_i32_0 : i32, i32
  }
  func.func @transform_6(%arg0: i32) -> (i32, i32) {
    %c0_i32 = arith.constant 0 : i32
    %c0_i32_0 = arith.constant 0 : i32
    %c0_i32_1 = arith.constant 0 : i32
    return %c0_i32, %c0_i32_0 : i32, i32
  }
  func.func @transform_7(%arg0: i32) -> (i32, i32) {
    %c0_i32 = arith.constant 0 : i32
    %c0_i32_0 = arith.constant 0 : i32
    %c0_i32_1 = arith.constant 0 : i32
    return %c0_i32, %c0_i32_0 : i32, i32
  }
  func.func @transform_8(%arg0: i32) -> (i32, i32) {
    %c0_i32 = arith.constant 0 : i32
    %c0_i32_0 = arith.constant 0 : i32
    %c0_i32_1 = arith.constant 0 : i32
    return %c0_i32, %c0_i32_0 : i32, i32
  }
  func.func @transform_9(%arg0: i32) -> (i32, i32) {
    %c0_i32 = arith.constant 0 : i32
    %c0_i32_0 = arith.constant 0 : i32
    %c0_i32_1 = arith.constant 0 : i32
    return %c0_i32, %c0_i32_0 : i32, i32
  }
  func.func @transform_10(%arg0: i32) -> (i32, i32) {
    %c0_i32 = arith.constant 0 : i32
    %c0_i32_0 = arith.constant 0 : i32
    %c0_i32_1 = arith.constant 0 : i32
    return %c0_i32, %c0_i32_0 : i32, i32
  }
  func.func @transform_11(%arg0: i32) -> (i32, i32) {
    %c0_i32 = arith.constant 0 : i32
    %c0_i32_0 = arith.constant 0 : i32
    %c0_i32_1 = arith.constant 0 : i32
    return %c0_i32, %c0_i32_0 : i32, i32
  }
  func.func @transform_12(%arg0: i32) -> (i32, i32) {
    %c0_i32 = arith.constant 0 : i32
    %c0_i32_0 = arith.constant 0 : i32
    %c0_i32_1 = arith.constant 0 : i32
    return %c0_i32, %c0_i32_0 : i32, i32
  }
  func.func @transform_13(%arg0: i32) -> (i32, i32) {
    %c0_i32 = arith.constant 0 : i32
    %c0_i32_0 = arith.constant 0 : i32
    %c0_i32_1 = arith.constant 0 : i32
    return %c0_i32, %c0_i32_0 : i32, i32
  }
  func.func @transform_14(%arg0: i32) -> (i32, i32) {
    %c0_i32 = arith.constant 0 : i32
    %c0_i32_0 = arith.constant 0 : i32
    %c0_i32_1 = arith.constant 0 : i32
    return %c0_i32, %c0_i32_0 : i32, i32
  }
  func.func @transform_15(%arg0: i32) -> (i32, i32) {
    %c0_i32 = arith.constant 0 : i32
    %c0_i32_0 = arith.constant 0 : i32
    %c0_i32_1 = arith.constant 0 : i32
    return %c0_i32, %c0_i32_0 : i32, i32
  }
  func.func @transform_16(%arg0: i32) -> (i32, i32) {
    %c0_i32 = arith.constant 0 : i32
    %c0_i32_0 = arith.constant 0 : i32
    %c0_i32_1 = arith.constant 0 : i32
    return %c0_i32, %c0_i32_0 : i32, i32
  }
  func.func @transform_17(%arg0: i32) -> (i32, i32) {
    %c0_i32 = arith.constant 0 : i32
    %c0_i32_0 = arith.constant 0 : i32
    %c0_i32_1 = arith.constant 0 : i32
    return %c0_i32, %c0_i32_0 : i32, i32
  }
  func.func @transform_18(%arg0: i32) -> (i32, i32) {
    %c0_i32 = arith.constant 0 : i32
    %c0_i32_0 = arith.constant 0 : i32
    %c0_i32_1 = arith.constant 0 : i32
    return %c0_i32, %c0_i32_0 : i32, i32
  }
  func.func @transform_19(%arg0: i32) -> (i32, i32) {
    %c0_i32 = arith.constant 0 : i32
    %c0_i32_0 = arith.constant 0 : i32
    %c0_i32_1 = arith.constant 0 : i32
    return %c0_i32, %c0_i32_0 : i32, i32
  }
  func.func @transform_20(%arg0: i32) -> (i32, i32) {
    %c0_i32 = arith.constant 0 : i32
    %c0_i32_0 = arith.constant 0 : i32
    return %arg0, %c0_i32 : i32, i32
  }
  func.func @transform_21(%arg0: i32) -> (i32, i32) {
    %c0_i32 = arith.constant 0 : i32
    %c0_i32_0 = arith.constant 0 : i32
    return %arg0, %c0_i32 : i32, i32
  }
}

</mosaic_0001>

<llo_original>
// kernel: rdgn_actor_forward.1
$region0: #{rdgn_actor_forward.1}
  #allocation0 [shape = 'u32[]', space=smem, size = 0x4, offset = 0x4, fixed_abs, tag = 'smem constant byte address 0x4 - core index']
  #allocation1 [shape = 'u32[144,128]{1,0:T(1,128)}', space=vmem, size = 0x12000, scoped, tag = 'internal scratch']
  %s0 = inlined_call_operand.vmem [shape: f32[2,8,16], index: 0, kind: input, shape index: {}]
  %s1 = inlined_call_operand.vmem [shape: f32[2,8,8], index: 1, kind: input, shape index: {}]
  %s2 = inlined_call_operand.vmem [shape: f32[1,16], index: 2, kind: input, shape index: {}]
  %s3 = inlined_call_operand.vmem [shape: f32[1,16], index: 3, kind: input, shape index: {}]
  %s4 = inlined_call_operand.hbm [shape: f32[16,64], index: 4, kind: input, shape index: {}]
  %s5 = inlined_call_operand.vmem [shape: f32[1,64], index: 5, kind: input, shape index: {}]
  %s6 = inlined_call_operand.hbm [shape: f32[1,64], index: 6, kind: input, shape index: {}]
  %s7 = inlined_call_operand.hbm [shape: f32[1,64], index: 7, kind: input, shape index: {}]
  %s8 = inlined_call_operand.vmem [shape: f32[64,64], index: 8, kind: input, shape index: {}]
  %s9 = inlined_call_operand.hbm [shape: f32[1,64], index: 9, kind: input, shape index: {}]
  %s10 = inlined_call_operand.hbm [shape: f32[1,64], index: 10, kind: input, shape index: {}]
  %s11 = inlined_call_operand.hbm [shape: f32[1,64], index: 11, kind: input, shape index: {}]
  %s12 = inlined_call_operand.vmem [shape: f32[64,64], index: 12, kind: input, shape index: {}]
  %s13 = inlined_call_operand.vmem [shape: f32[1,64], index: 13, kind: input, shape index: {}]
  %s14 = inlined_call_operand.hbm [shape: f32[64,64], index: 14, kind: input, shape index: {}]
  %s15 = inlined_call_operand.vmem [shape: f32[1,64], index: 15, kind: input, shape index: {}]
  %s16 = inlined_call_operand.hbm [shape: f32[64,64], index: 16, kind: input, shape index: {}]
  %s17 = inlined_call_operand.vmem [shape: f32[1,64], index: 17, kind: input, shape index: {}]
  %s18 = inlined_call_operand.vmem [shape: f32[128,5], index: 18, kind: input, shape index: {}]
  %s19 = inlined_call_operand.vmem [shape: f32[1,5], index: 19, kind: input, shape index: {}]
  %s20 = inlined_call_operand.vmem [shape: s32[2,1], index: 20, kind: output, shape index: {0}]
  %s21 = inlined_call_operand.vmem [shape: f32[2,1], index: 21, kind: output, shape index: {1}]
  %22 = xla_tuple %s20, %s21
  %s23 = sld [smem:[#allocation0]]
  $region130: #{rdgn_actor_forward.1} parent=0
    _
  %s25 = ssub.s32 1, %s23
  %s26 = scalar_select 0, %s25, %s23
  $region1: #{rdgn_actor_forward.1} parent=0
    #allocation2 [shape = 'u8[8192]{0}', space=vmem, size = 0x2000, scoped, tag = 'input window, operand 4, single buffered']
    #allocation3 [shape = 's32[1]{0}', space=sflag, size = 0x4, scoped, tag = 'scoped memory for rdgn_actor_forward.1']
    #allocation4 [shape = 'u8[512]{0}', space=vmem, size = 0x400, scoped, tag = 'input window, operand 6, single buffered']
    #allocation5 [shape = 's32[1]{0}', space=sflag, size = 0x4, scoped, tag = 'scoped memory for rdgn_actor_forward.1']
    #allocation6 [shape = 'u8[512]{0}', space=vmem, size = 0x400, scoped, tag = 'input window, operand 7, single buffered']
    #allocation7 [shape = 'u8[512]{0}', space=vmem, size = 0x400, scoped, tag = 'input window, operand 9, single buffered']
    #allocation8 [shape = 's32[1]{0}', space=sflag, size = 0x4, scoped, tag = 'scoped memory for rdgn_actor_forward.1']
    #allocation9 [shape = 'u8[512]{0}', space=vmem, size = 0x400, scoped, tag = 'input window, operand 10, single buffered']
    #allocation10 [shape = 'u8[512]{0}', space=vmem, size = 0x400, scoped, tag = 'input window, operand 11, single buffered']
    #allocation11 [shape = 's32[1]{0}', space=sflag, size = 0x4, scoped, tag = 'scoped memory for rdgn_actor_forward.1']
    #allocation12 [shape = 'u8[32768]{0}', space=vmem, size = 0x8000, scoped, tag = 'input window, operand 14, single buffered']
    #allocation13 [shape = 'u8[32768]{0}', space=vmem, size = 0x8000, scoped, tag = 'input window, operand 16, single buffered']
    #allocation14 [shape = 's32[1]{0}', space=sflag, size = 0x4, scoped, tag = 'scoped memory for rdgn_actor_forward.1']
    %27 = vsyncpa [#allocation3], 0
    %28 = vsyncpa [#allocation5], 0
    %29 = vsyncpa [#allocation8], 0
    %30 = vsyncpa [#allocation11], 0
    %31 = vsyncpa [#allocation14], 0
    // Predicated region
    $region2: #{rdgn_actor_forward.1} parent=1 // pred_check
      _
    $region3: #{rdgn_actor_forward.1} parent=1 // pred_check_branch
      %33 = sbr.rel (0) target = $region5
    $region4: #{rdgn_actor_forward.1} parent=1 // pred_region
      _
    $region5: #{rdgn_actor_forward.1} parent=1 // pred_fallthru
      _
    // Predicated region
    $region6: #{rdgn_actor_forward.1} parent=1 // pred_check
      _
    $region7: #{rdgn_actor_forward.1} parent=1 // pred_check_branch
      %35 = sbr.rel (0) target = $region9
    $region8: #{rdgn_actor_forward.1} parent=1 // pred_region
      _
    $region9: #{rdgn_actor_forward.1} parent=1 // pred_fallthru
      _
    // Predicated region
    $region10: #{rdgn_actor_forward.1} parent=1 // pred_check
      _
    $region11: #{rdgn_actor_forward.1} parent=1 // pred_check_branch
      %37 = sbr.rel (0) target = $region13
    $region12: #{rdgn_actor_forward.1} parent=1 // pred_region
      _
    $region13: #{rdgn_actor_forward.1} parent=1 // pred_fallthru
      _
    // Predicated region
    $region14: #{rdgn_actor_forward.1} parent=1 // pred_check
      _
    $region15: #{rdgn_actor_forward.1} parent=1 // pred_check_branch
      %39 = sbr.rel (0) target = $region17
    $region16: #{rdgn_actor_forward.1} parent=1 // pred_region
      _
    $region17: #{rdgn_actor_forward.1} parent=1 // pred_fallthru
      _
    // Predicated region
    $region18: #{rdgn_actor_forward.1} parent=1 // pred_check
      _
    $region19: #{rdgn_actor_forward.1} parent=1 // pred_check_branch
      %41 = sbr.rel (0) target = $region21
    $region20: #{rdgn_actor_forward.1} parent=1 // pred_region
      %s43 = ssub.s32 256, 256
      %44 = vsyncadd [#allocation3], %s43
      %s45 = sshll.u32 [#allocation2], 4
      %s46 = int_to_ptr.vmem [resolvable:$true] %s45
      %51 = dma.hbm_to_vmem [thread:$0]  %s4, 256, %s46, [#allocation3], 128, 128, 8
    $region21: #{rdgn_actor_forward.1} parent=1 // pred_fallthru
      _
    // Predicated region
    $region22: #{rdgn_actor_forward.1} parent=1 // pred_check
      _
    $region23: #{rdgn_actor_forward.1} parent=1 // pred_check_branch
      %53 = sbr.rel (0) target = $region25
    $region24: #{rdgn_actor_forward.1} parent=1 // pred_region
      _
    $region25: #{rdgn_actor_forward.1} parent=1 // pred_fallthru
      _
    // Predicated region
    $region26: #{rdgn_actor_forward.1} parent=1 // pred_check
      _
    $region27: #{rdgn_actor_forward.1} parent=1 // pred_check_branch
      %55 = sbr.rel (0) target = $region29
    $region28: #{rdgn_actor_forward.1} parent=1 // pred_region
      %s57 = ssub.s32 16, 16
      %58 = vsyncadd [#allocation5], %s57
      %s60 = sshll.u32 [#allocation4], 4
      %s61 = int_to_ptr.vmem [resolvable:$true] %s60
      %63 = dma.hbm_to_vmem [thread:$0]  %s6, 16, %s61, [#allocation5]
    $region29: #{rdgn_actor_forward.1} parent=1 // pred_fallthru
      _
    // Predicated region
    $region30: #{rdgn_actor_forward.1} parent=1 // pred_check
      _
    $region31: #{rdgn_actor_forward.1} parent=1 // pred_check_branch
      %65 = sbr.rel (0) target = $region33
    $region32: #{rdgn_actor_forward.1} parent=1 // pred_region
      %s67 = ssub.s32 16, 16
      %68 = vsyncadd [#allocation5], %s67
      %s70 = sshll.u32 [#allocation6], 4
      %s71 = int_to_ptr.vmem [resolvable:$true] %s70
      %73 = dma.hbm_to_vmem [thread:$0]  %s7, 16, %s71, [#allocation5]
    $region33: #{rdgn_actor_forward.1} parent=1 // pred_fallthru
      _
    // Predicated region
    $region34: #{rdgn_actor_forward.1} parent=1 // pred_check
      _
    $region35: #{rdgn_actor_forward.1} parent=1 // pred_check_branch
      %75 = sbr.rel (0) target = $region37
    $region36: #{rdgn_actor_forward.1} parent=1 // pred_region
      _
    $region37: #{rdgn_actor_forward.1} parent=1 // pred_fallthru
      _
    // Predicated region
    $region38: #{rdgn_actor_forward.1} parent=1 // pred_check
      _
    $region39: #{rdgn_actor_forward.1} parent=1 // pred_check_branch
      %77 = sbr.rel (0) target = $region41
    $region40: #{rdgn_actor_forward.1} parent=1 // pred_region
      %s79 = ssub.s32 16, 16
      %80 = vsyncadd [#allocation8], %s79
      %s82 = sshll.u32 [#allocation7], 4
      %s83 = int_to_ptr.vmem [resolvable:$true] %s82
      %85 = dma.hbm_to_vmem [thread:$0]  %s9, 16, %s83, [#allocation8]
    $region41: #{rdgn_actor_forward.1} parent=1 // pred_fallthru
      _
    // Predicated region
    $region42: #{rdgn_actor_forward.1} parent=1 // pred_check
      _
    $region43: #{rdgn_actor_forward.1} parent=1 // pred_check_branch
      %87 = sbr.rel (0) target = $region45
    $region44: #{rdgn_actor_forward.1} parent=1 // pred_region
      %s89 = ssub.s32 16, 16
      %90 = vsyncadd [#allocation8], %s89
      %s92 = sshll.u32 [#allocation9], 4
      %s93 = int_to_ptr.vmem [resolvable:$true] %s92
      %95 = dma.hbm_to_vmem [thread:$0]  %s10, 16, %s93, [#allocation8]
    $region45: #{rdgn_actor_forward.1} parent=1 // pred_fallthru
      _
    // Predicated region
    $region46: #{rdgn_actor_forward.1} parent=1 // pred_check
      _
    $region47: #{rdgn_actor_forward.1} parent=1 // pred_check_branch
      %97 = sbr.rel (0) target = $region49
    $region48: #{rdgn_actor_forward.1} parent=1 // pred_region
      %s99 = ssub.s32 16, 16
      %100 = vsyncadd [#allocation11], %s99
      %s102 = sshll.u32 [#allocation10], 4
      %s103 = int_to_ptr.vmem [resolvable:$true] %s102
      %105 = dma.hbm_to_vmem [thread:$0]  %s11, 16, %s103, [#allocation11]
    $region49: #{rdgn_actor_forward.1} parent=1 // pred_fallthru
      _
    // Predicated region
    $region50: #{rdgn_actor_forward.1} parent=1 // pred_check
      _
    $region51: #{rdgn_actor_forward.1} parent=1 // pred_check_branch
      %107 = sbr.rel (0) target = $region53
    $region52: #{rdgn_actor_forward.1} parent=1 // pred_region
      _
    $region53: #{rdgn_actor_forward.1} parent=1 // pred_fallthru
      _
    // Predicated region
    $region54: #{rdgn_actor_forward.1} parent=1 // pred_check
      _
    $region55: #{rdgn_actor_forward.1} parent=1 // pred_check_branch
      %109 = sbr.rel (0) target = $region57
    $region56: #{rdgn_actor_forward.1} parent=1 // pred_region
      _
    $region57: #{rdgn_actor_forward.1} parent=1 // pred_fallthru
      _
    // Predicated region
    $region58: #{rdgn_actor_forward.1} parent=1 // pred_check
      _
    $region59: #{rdgn_actor_forward.1} parent=1 // pred_check_branch
      %111 = sbr.rel (0) target = $region61
    $region60: #{rdgn_actor_forward.1} parent=1 // pred_region
      %s113 = ssub.s32 1024, 1024
      %114 = vsyncadd [#allocation11], %s113
      %s115 = sshll.u32 [#allocation12], 4
      %s116 = int_to_ptr.vmem [resolvable:$true] %s115
      %121 = dma.hbm_to_vmem [thread:$0]  %s14, 1024, %s116, [#allocation11], 128, 128, 8
    $region61: #{rdgn_actor_forward.1} parent=1 // pred_fallthru
      _
    // Predicated region
    $region62: #{rdgn_actor_forward.1} parent=1 // pred_check
      _
    $region63: #{rdgn_actor_forward.1} parent=1 // pred_check_branch
      %123 = sbr.rel (0) target = $region65
    $region64: #{rdgn_actor_forward.1} parent=1 // pred_region
      _
    $region65: #{rdgn_actor_forward.1} parent=1 // pred_fallthru
      _
    // Predicated region
    $region66: #{rdgn_actor_forward.1} parent=1 // pred_check
      _
    $region67: #{rdgn_actor_forward.1} parent=1 // pred_check_branch
      %125 = sbr.rel (0) target = $region69
    $region68: #{rdgn_actor_forward.1} parent=1 // pred_region
      %s127 = ssub.s32 1024, 1024
      %128 = vsyncadd [#allocation14], %s127
      %s129 = sshll.u32 [#allocation13], 4
      %s130 = int_to_ptr.vmem [resolvable:$true] %s129
      %135 = dma.hbm_to_vmem [thread:$0]  %s16, 1024, %s130, [#allocation14], 128, 128, 8
    $region69: #{rdgn_actor_forward.1} parent=1 // pred_fallthru
      _
    // Predicated region
    $region70: #{rdgn_actor_forward.1} parent=1 // pred_check
      _
    $region71: #{rdgn_actor_forward.1} parent=1 // pred_check_branch
      %137 = sbr.rel (0) target = $region73
    $region72: #{rdgn_actor_forward.1} parent=1 // pred_region
      _
    $region73: #{rdgn_actor_forward.1} parent=1 // pred_fallthru
      _
    // Predicated region
    $region74: #{rdgn_actor_forward.1} parent=1 // pred_check
      _
    $region75: #{rdgn_actor_forward.1} parent=1 // pred_check_branch
      %139 = sbr.rel (0) target = $region77
    $region76: #{rdgn_actor_forward.1} parent=1 // pred_region
      _
    $region77: #{rdgn_actor_forward.1} parent=1 // pred_fallthru
      _
    // Predicated region
    $region78: #{rdgn_actor_forward.1} parent=1 // pred_check
      _
    $region79: #{rdgn_actor_forward.1} parent=1 // pred_check_branch
      %141 = sbr.rel (0) target = $region81
    $region80: #{rdgn_actor_forward.1} parent=1 // pred_region
      _
    $region81: #{rdgn_actor_forward.1} parent=1 // pred_fallthru
      _
    // Predicated region
    $region82: #{rdgn_actor_forward.1} parent=1 // pred_check
      _
    $region83: #{rdgn_actor_forward.1} parent=1 // pred_check_branch
      %143 = sbr.rel (0) target = $region85
    $region84: #{rdgn_actor_forward.1} parent=1 // pred_region
      %144 = dma.done [#allocation3], 256
    $region85: #{rdgn_actor_forward.1} parent=1 // pred_fallthru
      _
    // Predicated region
    $region86: #{rdgn_actor_forward.1} parent=1 // pred_check
      _
    $region87: #{rdgn_actor_forward.1} parent=1 // pred_check_branch
      %146 = sbr.rel (0) target = $region89
    $region88: #{rdgn_actor_forward.1} parent=1 // pred_region
      %147 = dma.done [#allocation5], 16
    $region89: #{rdgn_actor_forward.1} parent=1 // pred_fallthru
      _
    // Predicated region
    $region90: #{rdgn_actor_forward.1} parent=1 // pred_check
      _
    $region91: #{rdgn_actor_forward.1} parent=1 // pred_check_branch
      %149 = sbr.rel (0) target = $region93
    $region92: #{rdgn_actor_forward.1} parent=1 // pred_region
      %150 = dma.done [#allocation5], 16
    $region93: #{rdgn_actor_forward.1} parent=1 // pred_fallthru
      _
    // Predicated region
    $region94: #{rdgn_actor_forward.1} parent=1 // pred_check
      _
    $region95: #{rdgn_actor_forward.1} parent=1 // pred_check_branch
      %152 = sbr.rel (0) target = $region97
    $region96: #{rdgn_actor_forward.1} parent=1 // pred_region
      %153 = dma.done [#allocation8], 16
    $region97: #{rdgn_actor_forward.1} parent=1 // pred_fallthru
      _
    // Predicated region
    $region98: #{rdgn_actor_forward.1} parent=1 // pred_check
      _
    $region99: #{rdgn_actor_forward.1} parent=1 // pred_check_branch
      %155 = sbr.rel (0) target = $region101
    $region100: #{rdgn_actor_forward.1} parent=1 // pred_region
      %156 = dma.done [#allocation8], 16
    $region101: #{rdgn_actor_forward.1} parent=1 // pred_fallthru
      _
    // Predicated region
    $region102: #{rdgn_actor_forward.1} parent=1 // pred_check
      _
    $region103: #{rdgn_actor_forward.1} parent=1 // pred_check_branch
      %158 = sbr.rel (0) target = $region105
    $region104: #{rdgn_actor_forward.1} parent=1 // pred_region
      %159 = dma.done [#allocation11], 16
    $region105: #{rdgn_actor_forward.1} parent=1 // pred_fallthru
      _
    // Predicated region
    $region106: #{rdgn_actor_forward.1} parent=1 // pred_check
      _
    $region107: #{rdgn_actor_forward.1} parent=1 // pred_check_branch
      %161 = sbr.rel (0) target = $region109
    $region108: #{rdgn_actor_forward.1} parent=1 // pred_region
      %162 = dma.done [#allocation11], 1024
    $region109: #{rdgn_actor_forward.1} parent=1 // pred_fallthru
      _
    // Predicated region
    $region110: #{rdgn_actor_forward.1} parent=1 // pred_check
      _
    $region111: #{rdgn_actor_forward.1} parent=1 // pred_check_branch
      %164 = sbr.rel (0) target = $region113
    $region112: #{rdgn_actor_forward.1} parent=1 // pred_region
      %165 = dma.done [#allocation14], 1024
    $region113: #{rdgn_actor_forward.1} parent=1 // pred_fallthru
      _
    %v166 = vld [vmem:[%s0] sm:$0xff]
    %v167 = vld [vmem:[%s0 + $0x8] sm:$0xff]
    %v168 = vld [vmem:[%s2] sm:$0x1]
    %v169 = vld [vmem:[%s3] sm:$0x1]
    %vm170 = vcmask 130048
    %v171 = vsel %vm170, %v166, 0.0
    %172 = vadd.xlane.f32.xlu0 %v171
    %v173 = vpop.xlane.xlu0 %172
    %v174 = vsel %vm170, %v167, 0.0
    %175 = vadd.xlane.f32.xlu0 %v174
    %v176 = vpop.xlane.xlu0 %175
    %v177 = vrcp.pop 16.0
    %v178 = vmul.f32 %v173, %v177
    %v179 = vmul.f32 %v176, %v177
    %v180 = vsub.f32 %v166, %v178
    %v181 = vsub.f32 %v167, %v179
    %v182 = vmul.f32 %v180, %v180
    %v183 = vmul.f32 %v181, %v181
    %v184 = vsel %vm170, %v182, 0.0
    %185 = vadd.xlane.f32.xlu0 %v184
    %v186 = vpop.xlane.xlu0 %185
    %v187 = vsel %vm170, %v183, 0.0
    %188 = vadd.xlane.f32.xlu0 %v187
    %v189 = vpop.xlane.xlu0 %188
    %v190 = vmul.f32 %v186, %v177
    %v191 = vmul.f32 %v189, %v177
    %v192 = vadd.f32 %v190, 1e-05
    %v193 = vadd.f32 %v191, 1e-05
    %v194 = vrsqrt.pop %v192
    %v195 = vrsqrt.pop %v193
    %v196 = vmul.f32 %v180, %v194
    %v197 = vmul.f32 %v181, %v195
    %v199 = vlaneseq
    %v200 = vshrl.u32 %v199, 7
    %v201 = vsub.s32 0, %v200
    %v202 = vrot.slane %v168, %v201
    %v204 = vmul.f32 %v196, %v202
    %v205 = vmul.f32 %v197, %v202
    %v207 = vlaneseq
    %v208 = vshrl.u32 %v207, 7
    %v209 = vsub.s32 0, %v208
    %v210 = vrot.slane %v169, %v209
    %v212 = vadd.f32 %v204, %v210
    %v213 = vadd.f32 %v205, %v210
    %v214 = vld [vmem:[#allocation2] sm:$0xff]
    %v215 = vld [vmem:[#allocation2 + $0x8] sm:$0xff]
    %v216 = vld [vmem:[%s5] sm:$0x1]
    %v218 = vlaneseq
    %v219 = vshrl.u32 %v218, 7
    %v220 = vsub.s32 0, %v219
    %v221 = vrot.slane %v216, %v220
    %v224 = vsel %vm170, %v212, 0
    %v227 = vsel %vm170, %v213, 0
    %229 = vmatprep.subr.mxu0 0.0
    %230 = vmatpush1.msra.mxu0 %v214
    %231 = vmatprep.subr.mxu0 0.0
    %232 = vmatpush1.msra.mxu0 %v215
    %233 = vmatprep.subr.mxu0 0.0
    %234 = vmatpush1.msra.mxu0 0.0
    %235 = vmatprep.subr.mxu0 0.0
    %236 = vmatpush1.msra.mxu0 0.0
    %237 = vmatprep.subr.mxu0 0.0
    %238 = vmatpush1.msra.mxu0 0.0
    %239 = vmatprep.subr.mxu0 0.0
    %240 = vmatpush1.msra.mxu0 0.0
    %241 = vmatprep.subr.mxu0 0.0
    %242 = vmatpush1.msra.mxu0 0.0
    %243 = vmatprep.subr.mxu0 0.0
    %244 = vmatpush1.msra.mxu0 0.0
    %245 = vmatprep.subr.mxu0 0.0
    %246 = vmatpush1.msra.mxu0 0.0
    %247 = vmatprep.subr.mxu0 0.0
    %248 = vmatpush1.msra.mxu0 0.0
    %249 = vmatprep.subr.mxu0 0.0
    %250 = vmatpush1.msra.mxu0 0.0
    %251 = vmatprep.subr.mxu0 0.0
    %252 = vmatpush1.msra.mxu0 0.0
    %253 = vmatprep.subr.mxu0 0.0
    %254 = vmatpush1.msra.mxu0 0.0
    %255 = vmatprep.subr.mxu0 0.0
    %256 = vmatpush1.msra.mxu0 0.0
    %257 = vmatprep.subr.mxu0 0.0
    %258 = vmatpush1.msra.mxu0 0.0
    %259 = vmatprep.subr.mxu0 0.0
    %260 = vmatpush1.msra.mxu0 0.0
    %261 = vmatprep.subr.mxu0 0.0
    %262 = vmatpush1.msra.mxu0 0.0
    %263 = vmatprep.subr.mxu0 0.0
    %264 = vmatpush1.msra.mxu0 0.0
    %265 = vmatprep.subr.mxu0 0.0
    %266 = vmatpush1.msra.mxu0 0.0
    %267 = vmatprep.subr.mxu0 0.0
    %268 = vmatpush1.msra.mxu0 0.0
    %269 = vmatprep.subr.mxu0 0.0
    %270 = vmatpush1.msra.mxu0 0.0
    %271 = vmatprep.subr.mxu0 0.0
    %272 = vmatpush1.msra.mxu0 0.0
    %273 = vmatprep.subr.mxu0 0.0
    %274 = vmatpush1.msra.mxu0 0.0
    %275 = vmatprep.subr.mxu0 0.0
    %276 = vmatpush1.msra.mxu0 0.0
    %277 = vmatprep.subr.mxu0 0.0
    %278 = vmatpush1.msra.mxu0 0.0
    %279 = vmatprep.subr.mxu0 0.0
    %280 = vmatpush1.msra.mxu0 0.0
    %281 = vmatprep.subr.mxu0 0.0
    %282 = vmatpush1.msra.mxu0 0.0
    %283 = vmatprep.subr.mxu0 0.0
    %284 = vmatpush1.msra.mxu0 0.0
    %285 = vmatprep.subr.mxu0 0.0
    %286 = vmatpush1.msra.mxu0 0.0
    %287 = vmatprep.subr.mxu0 0.0
    %288 = vmatpush1.msra.mxu0 0.0
    %289 = vmatprep.subr.mxu0 0.0
    %290 = vmatpush1.msra.mxu0 0.0
    %291 = vmatprep.subr.mxu0 0.0
    %292 = vmatpush1.msra.mxu0 0.0
    %293 = vmatprep.mubr.f32.mxu0 0.0
    %294 = vmatmul.mubr.f32.gmra.mrb[0].mxu0 %v224
    %v295 = vpop.f32.mrb[0].mxu0
    %v296 = vadd.f32 %v221, %v295
    %v297 = vpop.f32.mrb[0].mxu0
    %298 = vmatprep.mubr.f32.mxu0 0.0
    %299 = vmatmul.mubr.f32.gmra.mrb[0].mxu0 %v227
    %v300 = vpop.f32.mrb[0].mxu0
    %v301 = vadd.f32 %v221, %v300
    %v302 = vpop.f32.mrb[0].mxu0
    %303 = vdwg.mxu0
    %v304 = vmax.f32 %v296, 0.0
    %v305 = vmax.f32 %v301, 0.0
    %v306 = vld [vmem:[#allocation4] sm:$0x1]
    %v307 = vld [vmem:[#allocation6] sm:$0x1]
    %vm308 = vcmask 523264
    %v309 = vsel %vm308, %v304, 0.0
    %310 = vadd.xlane.f32.xlu0 %v309
    %v311 = vpop.xlane.xlu0 %310
    %v312 = vsel %vm308, %v305, 0.0
    %313 = vadd.xlane.f32.xlu0 %v312
    %v314 = vpop.xlane.xlu0 %313
    %v315 = vrcp.pop 64.0
    %v316 = vmul.f32 %v311, %v315
    %v317 = vmul.f32 %v314, %v315
    %v318 = vsub.f32 %v304, %v316
    %v319 = vsub.f32 %v305, %v317
    %v320 = vmul.f32 %v318, %v318
    %v321 = vmul.f32 %v319, %v319
    %v322 = vsel %vm308, %v320, 0.0
    %323 = vadd.xlane.f32.xlu0 %v322
    %v324 = vpop.xlane.xlu0 %323
    %v325 = vsel %vm308, %v321, 0.0
    %326 = vadd.xlane.f32.xlu0 %v325
    %v327 = vpop.xlane.xlu0 %326
    %v328 = vmul.f32 %v324, %v315
    %v329 = vmul.f32 %v327, %v315
    %v330 = vadd.f32 %v328, 1e-05
    %v331 = vadd.f32 %v329, 1e-05
    %v332 = vrsqrt.pop %v330
    %v333 = vrsqrt.pop %v331
    %v334 = vmul.f32 %v318, %v332
    %v335 = vmul.f32 %v319, %v333
    %v337 = vlaneseq
    %v338 = vshrl.u32 %v337, 7
    %v339 = vsub.s32 0, %v338
    %v340 = vrot.slane %v306, %v339
    %v342 = vmul.f32 %v334, %v340
    %v343 = vmul.f32 %v335, %v340
    %v345 = vlaneseq
    %v346 = vshrl.u32 %v345, 7
    %v347 = vsub.s32 0, %v346
    %v348 = vrot.slane %v307, %v347
    %v350 = vadd.f32 %v342, %v348
    %v351 = vadd.f32 %v343, %v348
    %v352 = vld [vmem:[%s8] sm:$0xff]
    %v353 = vld [vmem:[%s8 + $0x8] sm:$0xff]
    %v354 = vld [vmem:[%s8 + $0x10] sm:$0xff]
    %v355 = vld [vmem:[%s8 + $0x18] sm:$0xff]
    %v356 = vld [vmem:[%s8 + $0x20] sm:$0xff]
    %v357 = vld [vmem:[%s8 + $0x28] sm:$0xff]
    %v358 = vld [vmem:[%s8 + $0x30] sm:$0xff]
    %v359 = vld [vmem:[%s8 + $0x38] sm:$0xff]
    %v360 = vld [vmem:[#allocation7] sm:$0x1]
    %v362 = vlaneseq
    %v363 = vshrl.u32 %v362, 7
    %v364 = vsub.s32 0, %v363
    %v365 = vrot.slane %v360, %v364
    %v368 = vsel %vm308, %v350, 0
    %v371 = vsel %vm308, %v351, 0
    %373 = vmatprep.subr.mxu0 0.0
    %374 = vmatpush1.msra.mxu0 %v352
    %375 = vmatprep.subr.mxu0 0.0
    %376 = vmatpush1.msra.mxu0 %v353
    %377 = vmatprep.subr.mxu0 0.0
    %378 = vmatpush1.msra.mxu0 %v354
    %379 = vmatprep.subr.mxu0 0.0
    %380 = vmatpush1.msra.mxu0 %v355
    %381 = vmatprep.subr.mxu0 0.0
    %382 = vmatpush1.msra.mxu0 %v356
    %383 = vmatprep.subr.mxu0 0.0
    %384 = vmatpush1.msra.mxu0 %v357
    %385 = vmatprep.subr.mxu0 0.0
    %386 = vmatpush1.msra.mxu0 %v358
    %387 = vmatprep.subr.mxu0 0.0
    %388 = vmatpush1.msra.mxu0 %v359
    %389 = vmatprep.subr.mxu0 0.0
    %390 = vmatpush1.msra.mxu0 0.0
    %391 = vmatprep.subr.mxu0 0.0
    %392 = vmatpush1.msra.mxu0 0.0
    %393 = vmatprep.subr.mxu0 0.0
    %394 = vmatpush1.msra.mxu0 0.0
    %395 = vmatprep.subr.mxu0 0.0
    %396 = vmatpush1.msra.mxu0 0.0
    %397 = vmatprep.subr.mxu0 0.0
    %398 = vmatpush1.msra.mxu0 0.0
    %399 = vmatprep.subr.mxu0 0.0
    %400 = vmatpush1.msra.mxu0 0.0
    %401 = vmatprep.subr.mxu0 0.0
    %402 = vmatpush1.msra.mxu0 0.0
    %403 = vmatprep.subr.mxu0 0.0
    %404 = vmatpush1.msra.mxu0 0.0
    %405 = vmatprep.subr.mxu0 0.0
    %406 = vmatpush1.msra.mxu0 0.0
    %407 = vmatprep.subr.mxu0 0.0
    %408 = vmatpush1.msra.mxu0 0.0
    %409 = vmatprep.subr.mxu0 0.0
    %410 = vmatpush1.msra.mxu0 0.0
    %411 = vmatprep.subr.mxu0 0.0
    %412 = vmatpush1.msra.mxu0 0.0
    %413 = vmatprep.subr.mxu0 0.0
    %414 = vmatpush1.msra.mxu0 0.0
    %415 = vmatprep.subr.mxu0 0.0
    %416 = vmatpush1.msra.mxu0 0.0
    %417 = vmatprep.subr.mxu0 0.0
    %418 = vmatpush1.msra.mxu0 0.0
    %419 = vmatprep.subr.mxu0 0.0
    %420 = vmatpush1.msra.mxu0 0.0
    %421 = vmatprep.subr.mxu0 0.0
    %422 = vmatpush1.msra.mxu0 0.0
    %423 = vmatprep.subr.mxu0 0.0
    %424 = vmatpush1.msra.mxu0 0.0
    %425 = vmatprep.subr.mxu0 0.0
    %426 = vmatpush1.msra.mxu0 0.0
    %427 = vmatprep.subr.mxu0 0.0
    %428 = vmatpush1.msra.mxu0 0.0
    %429 = vmatprep.subr.mxu0 0.0
    %430 = vmatpush1.msra.mxu0 0.0
    %431 = vmatprep.subr.mxu0 0.0
    %432 = vmatpush1.msra.mxu0 0.0
    %433 = vmatprep.subr.mxu0 0.0
    %434 = vmatpush1.msra.mxu0 0.0
    %435 = vmatprep.subr.mxu0 0.0
    %436 = vmatpush1.msra.mxu0 0.0
    %437 = vmatprep.mubr.f32.mxu0 0.0
    %438 = vmatmul.mubr.f32.gmra.mrb[0].mxu0 %v368
    %v439 = vpop.f32.mrb[0].mxu0
    %v440 = vadd.f32 %v365, %v439
    %v441 = vpop.f32.mrb[0].mxu0
    %442 = vmatprep.mubr.f32.mxu0 0.0
    %443 = vmatmul.mubr.f32.gmra.mrb[0].mxu0 %v371
    %v444 = vpop.f32.mrb[0].mxu0
    %v445 = vadd.f32 %v365, %v444
    %v446 = vpop.f32.mrb[0].mxu0
    %447 = vdwg.mxu0
    %v448 = vmax.f32 %v440, 0.0
    %v449 = vmax.f32 %v445, 0.0
    %v450 = vld [vmem:[#allocation9] sm:$0x1]
    %v451 = vld [vmem:[#allocation10] sm:$0x1]
    %v452 = vsel %vm308, %v448, 0.0
    %453 = vadd.xlane.f32.xlu0 %v452
    %v454 = vpop.xlane.xlu0 %453
    %v455 = vsel %vm308, %v449, 0.0
    %456 = vadd.xlane.f32.xlu0 %v455
    %v457 = vpop.xlane.xlu0 %456
    %v458 = vmul.f32 %v454, %v315
    %v459 = vmul.f32 %v457, %v315
    %v460 = vsub.f32 %v448, %v458
    %v461 = vsub.f32 %v449, %v459
    %v462 = vmul.f32 %v460, %v460
    %v463 = vmul.f32 %v461, %v461
    %v464 = vsel %vm308, %v462, 0.0
    %465 = vadd.xlane.f32.xlu0 %v464
    %v466 = vpop.xlane.xlu0 %465
    %v467 = vsel %vm308, %v463, 0.0
    %468 = vadd.xlane.f32.xlu0 %v467
    %v469 = vpop.xlane.xlu0 %468
    %v470 = vmul.f32 %v466, %v315
    %v471 = vmul.f32 %v469, %v315
    %v472 = vadd.f32 %v470, 1e-05
    %v473 = vadd.f32 %v471, 1e-05
    %v474 = vrsqrt.pop %v472
    %v475 = vrsqrt.pop %v473
    %v476 = vmul.f32 %v460, %v474
    %v477 = vmul.f32 %v461, %v475
    %v479 = vlaneseq
    %v480 = vshrl.u32 %v479, 7
    %v481 = vsub.s32 0, %v480
    %v482 = vrot.slane %v450, %v481
    %v484 = vmul.f32 %v476, %v482
    %v485 = vmul.f32 %v477, %v482
    %v487 = vlaneseq
    %v488 = vshrl.u32 %v487, 7
    %v489 = vsub.s32 0, %v488
    %v490 = vrot.slane %v451, %v489
    %v492 = vadd.f32 %v484, %v490
    %v493 = vadd.f32 %v485, %v490
    %v494 = vld [vmem:[%s12] sm:$0xff]
    %v495 = vld [vmem:[%s12 + $0x8] sm:$0xff]
    %v496 = vld [vmem:[%s12 + $0x10] sm:$0xff]
    %v497 = vld [vmem:[%s12 + $0x18] sm:$0xff]
    %v498 = vld [vmem:[%s12 + $0x20] sm:$0xff]
    %v499 = vld [vmem:[%s12 + $0x28] sm:$0xff]
    %v500 = vld [vmem:[%s12 + $0x30] sm:$0xff]
    %v501 = vld [vmem:[%s12 + $0x38] sm:$0xff]
    %v502 = vld [vmem:[%s13] sm:$0x1]
    %v504 = vlaneseq
    %v505 = vshrl.u32 %v504, 7
    %v506 = vsub.s32 0, %v505
    %v507 = vrot.slane %v502, %v506
    %v510 = vsel %vm308, %v492, 0
    %v513 = vsel %vm308, %v493, 0
    %515 = vmatprep.subr.mxu0 0.0
    %516 = vmatpush1.msra.mxu0 %v494
    %517 = vmatprep.subr.mxu0 0.0
    %518 = vmatpush1.msra.mxu0 %v495
    %519 = vmatprep.subr.mxu0 0.0
    %520 = vmatpush1.msra.mxu0 %v496
    %521 = vmatprep.subr.mxu0 0.0
    %522 = vmatpush1.msra.mxu0 %v497
    %523 = vmatprep.subr.mxu0 0.0
    %524 = vmatpush1.msra.mxu0 %v498
    %525 = vmatprep.subr.mxu0 0.0
    %526 = vmatpush1.msra.mxu0 %v499
    %527 = vmatprep.subr.mxu0 0.0
    %528 = vmatpush1.msra.mxu0 %v500
    %529 = vmatprep.subr.mxu0 0.0
    %530 = vmatpush1.msra.mxu0 %v501
    %531 = vmatprep.subr.mxu0 0.0
    %532 = vmatpush1.msra.mxu0 0.0
    %533 = vmatprep.subr.mxu0 0.0
    %534 = vmatpush1.msra.mxu0 0.0
    %535 = vmatprep.subr.mxu0 0.0
    %536 = vmatpush1.msra.mxu0 0.0
    %537 = vmatprep.subr.mxu0 0.0
    %538 = vmatpush1.msra.mxu0 0.0
    %539 = vmatprep.subr.mxu0 0.0
    %540 = vmatpush1.msra.mxu0 0.0
    %541 = vmatprep.subr.mxu0 0.0
    %542 = vmatpush1.msra.mxu0 0.0
    %543 = vmatprep.subr.mxu0 0.0
    %544 = vmatpush1.msra.mxu0 0.0
    %545 = vmatprep.subr.mxu0 0.0
    %546 = vmatpush1.msra.mxu0 0.0
    %547 = vmatprep.subr.mxu0 0.0
    %548 = vmatpush1.msra.mxu0 0.0
    %549 = vmatprep.subr.mxu0 0.0
    %550 = vmatpush1.msra.mxu0 0.0
    %551 = vmatprep.subr.mxu0 0.0
    %552 = vmatpush1.msra.mxu0 0.0
    %553 = vmatprep.subr.mxu0 0.0
    %554 = vmatpush1.msra.mxu0 0.0
    %555 = vmatprep.subr.mxu0 0.0
    %556 = vmatpush1.msra.mxu0 0.0
    %557 = vmatprep.subr.mxu0 0.0
    %558 = vmatpush1.msra.mxu0 0.0
    %559 = vmatprep.subr.mxu0 0.0
    %560 = vmatpush1.msra.mxu0 0.0
    %561 = vmatprep.subr.mxu0 0.0
    %562 = vmatpush1.msra.mxu0 0.0
    %563 = vmatprep.subr.mxu0 0.0
    %564 = vmatpush1.msra.mxu0 0.0
    %565 = vmatprep.subr.mxu0 0.0
    %566 = vmatpush1.msra.mxu0 0.0
    %567 = vmatprep.subr.mxu0 0.0
    %568 = vmatpush1.msra.mxu0 0.0
    %569 = vmatprep.subr.mxu0 0.0
    %570 = vmatpush1.msra.mxu0 0.0
    %571 = vmatprep.subr.mxu0 0.0
    %572 = vmatpush1.msra.mxu0 0.0
    %573 = vmatprep.subr.mxu0 0.0
    %574 = vmatpush1.msra.mxu0 0.0
    %575 = vmatprep.subr.mxu0 0.0
    %576 = vmatpush1.msra.mxu0 0.0
    %577 = vmatprep.subr.mxu0 0.0
    %578 = vmatpush1.msra.mxu0 0.0
    %579 = vmatprep.mubr.f32.mxu0 0.0
    %580 = vmatmul.mubr.f32.gmra.mrb[0].mxu0 %v510
    %v581 = vpop.f32.mrb[0].mxu0
    %v582 = vadd.f32 %v507, %v581
    %v583 = vpop.f32.mrb[0].mxu0
    %584 = vmatprep.mubr.f32.mxu0 0.0
    %585 = vmatmul.mubr.f32.gmra.mrb[0].mxu0 %v513
    %v586 = vpop.f32.mrb[0].mxu0
    %v587 = vadd.f32 %v507, %v586
    %v588 = vpop.f32.mrb[0].mxu0
    %589 = vdwg.mxu0
    %v590 = vmax.f32 %v582, 0.0
    %v591 = vmax.f32 %v587, 0.0
    %v592 = vld [vmem:[#allocation13] sm:$0xff]
    %v593 = vld [vmem:[#allocation13 + $0x8] sm:$0xff]
    %v594 = vld [vmem:[#allocation13 + $0x10] sm:$0xff]
    %v595 = vld [vmem:[#allocation13 + $0x18] sm:$0xff]
    %v596 = vld [vmem:[#allocation13 + $0x20] sm:$0xff]
    %v597 = vld [vmem:[#allocation13 + $0x28] sm:$0xff]
    %v598 = vld [vmem:[#allocation13 + $0x30] sm:$0xff]
    %v599 = vld [vmem:[#allocation13 + $0x38] sm:$0xff]
    %v600 = vld [vmem:[%s17] sm:$0x1]
    %v602 = vlaneseq
    %v603 = vshrl.u32 %v602, 7
    %v604 = vsub.s32 0, %v603
    %v605 = vrot.slane %v600, %v604
    %607 = vmatprep.subr.mxu0 0.0
    %608 = vmatpush1.msra.mxu0 %v592
    %609 = vmatprep.subr.mxu0 0.0
    %610 = vmatpush1.msra.mxu0 %v593
    %611 = vmatprep.subr.mxu0 0.0
    %612 = vmatpush1.msra.mxu0 %v594
    %613 = vmatprep.subr.mxu0 0.0
    %614 = vmatpush1.msra.mxu0 %v595
    %615 = vmatprep.subr.mxu0 0.0
    %616 = vmatpush1.msra.mxu0 %v596
    %617 = vmatprep.subr.mxu0 0.0
    %618 = vmatpush1.msra.mxu0 %v597
    %619 = vmatprep.subr.mxu0 0.0
    %620 = vmatpush1.msra.mxu0 %v598
    %621 = vmatprep.subr.mxu0 0.0
    %622 = vmatpush1.msra.mxu0 %v599
    %623 = vmatprep.subr.mxu0 0.0
    %624 = vmatpush1.msra.mxu0 0.0
    %625 = vmatprep.subr.mxu0 0.0
    %626 = vmatpush1.msra.mxu0 0.0
    %627 = vmatprep.subr.mxu0 0.0
    %628 = vmatpush1.msra.mxu0 0.0
    %629 = vmatprep.subr.mxu0 0.0
    %630 = vmatpush1.msra.mxu0 0.0
    %631 = vmatprep.subr.mxu0 0.0
    %632 = vmatpush1.msra.mxu0 0.0
    %633 = vmatprep.subr.mxu0 0.0
    %634 = vmatpush1.msra.mxu0 0.0
    %635 = vmatprep.subr.mxu0 0.0
    %636 = vmatpush1.msra.mxu0 0.0
    %637 = vmatprep.subr.mxu0 0.0
    %638 = vmatpush1.msra.mxu0 0.0
    %639 = vmatprep.subr.mxu0 0.0
    %640 = vmatpush1.msra.mxu0 0.0
    %641 = vmatprep.subr.mxu0 0.0
    %642 = vmatpush1.msra.mxu0 0.0
    %643 = vmatprep.subr.mxu0 0.0
    %644 = vmatpush1.msra.mxu0 0.0
    %645 = vmatprep.subr.mxu0 0.0
    %646 = vmatpush1.msra.mxu0 0.0
    %647 = vmatprep.subr.mxu0 0.0
    %648 = vmatpush1.msra.mxu0 0.0
    %649 = vmatprep.subr.mxu0 0.0
    %650 = vmatpush1.msra.mxu0 0.0
    %651 = vmatprep.subr.mxu0 0.0
    %652 = vmatpush1.msra.mxu0 0.0
    %653 = vmatprep.subr.mxu0 0.0
    %654 = vmatpush1.msra.mxu0 0.0
    %655 = vmatprep.subr.mxu0 0.0
    %656 = vmatpush1.msra.mxu0 0.0
    %657 = vmatprep.subr.mxu0 0.0
    %658 = vmatpush1.msra.mxu0 0.0
    %659 = vmatprep.subr.mxu0 0.0
    %660 = vmatpush1.msra.mxu0 0.0
    %661 = vmatprep.subr.mxu0 0.0
    %662 = vmatpush1.msra.mxu0 0.0
    %663 = vmatprep.subr.mxu0 0.0
    %664 = vmatpush1.msra.mxu0 0.0
    %665 = vmatprep.subr.mxu0 0.0
    %666 = vmatpush1.msra.mxu0 0.0
    %667 = vmatprep.subr.mxu0 0.0
    %668 = vmatpush1.msra.mxu0 0.0
    %669 = vmatprep.subr.mxu0 0.0
    %670 = vmatpush1.msra.mxu0 0.0
    %671 = vmatprep.mubr.f32.mxu0 0.0
    %672 = vmatmul.mubr.f32.gmra.mrb[0].mxu0 %v510
    %v673 = vpop.f32.mrb[0].mxu0
    %v674 = vadd.f32 %v605, %v673
    %v675 = vpop.f32.mrb[0].mxu0
    %676 = vmatprep.mubr.f32.mxu0 0.0
    %677 = vmatmul.mubr.f32.gmra.mrb[0].mxu0 %v513
    %v678 = vpop.f32.mrb[0].mxu0
    %v679 = vadd.f32 %v605, %v678
    %v680 = vpop.f32.mrb[0].mxu0
    %681 = vdwg.mxu0
    %v682 = vmax.f32 %v674, 0.0
    %v683 = vmax.f32 %v679, 0.0
    %v684 = vld [vmem:[#allocation12] sm:$0xff]
    %v685 = vld [vmem:[#allocation12 + $0x8] sm:$0xff]
    %v686 = vld [vmem:[#allocation12 + $0x10] sm:$0xff]
    %v687 = vld [vmem:[#allocation12 + $0x18] sm:$0xff]
    %v688 = vld [vmem:[#allocation12 + $0x20] sm:$0xff]
    %v689 = vld [vmem:[#allocation12 + $0x28] sm:$0xff]
    %v690 = vld [vmem:[#allocation12 + $0x30] sm:$0xff]
    %v691 = vld [vmem:[#allocation12 + $0x38] sm:$0xff]
    %v692 = vld [vmem:[%s15] sm:$0x1]
    %v694 = vlaneseq
    %v695 = vshrl.u32 %v694, 7
    %v696 = vsub.s32 0, %v695
    %v697 = vrot.slane %v692, %v696
    %v699 = vrot.slane %v492, 1
    %vm700 = vcmask 1041409
    %v701 = vsel %vm700, %v493, %v699
    %v702 = vsel %vm308, %v701, 0
    %704 = vmatprep.subr.mxu0 0.0
    %705 = vmatpush1.msra.mxu0 %v684
    %706 = vmatprep.subr.mxu0 0.0
    %707 = vmatpush1.msra.mxu0 %v685
    %708 = vmatprep.subr.mxu0 0.0
    %709 = vmatpush1.msra.mxu0 %v686
    %710 = vmatprep.subr.mxu0 0.0
    %711 = vmatpush1.msra.mxu0 %v687
    %712 = vmatprep.subr.mxu0 0.0
    %713 = vmatpush1.msra.mxu0 %v688
    %714 = vmatprep.subr.mxu0 0.0
    %715 = vmatpush1.msra.mxu0 %v689
    %716 = vmatprep.subr.mxu0 0.0
    %717 = vmatpush1.msra.mxu0 %v690
    %718 = vmatprep.subr.mxu0 0.0
    %719 = vmatpush1.msra.mxu0 %v691
    %720 = vmatprep.subr.mxu0 0.0
    %721 = vmatpush1.msra.mxu0 0.0
    %722 = vmatprep.subr.mxu0 0.0
    %723 = vmatpush1.msra.mxu0 0.0
    %724 = vmatprep.subr.mxu0 0.0
    %725 = vmatpush1.msra.mxu0 0.0
    %726 = vmatprep.subr.mxu0 0.0
    %727 = vmatpush1.msra.mxu0 0.0
    %728 = vmatprep.subr.mxu0 0.0
    %729 = vmatpush1.msra.mxu0 0.0
    %730 = vmatprep.subr.mxu0 0.0
    %731 = vmatpush1.msra.mxu0 0.0
    %732 = vmatprep.subr.mxu0 0.0
    %733 = vmatpush1.msra.mxu0 0.0
    %734 = vmatprep.subr.mxu0 0.0
    %735 = vmatpush1.msra.mxu0 0.0
    %736 = vmatprep.subr.mxu0 0.0
    %737 = vmatpush1.msra.mxu0 0.0
    %738 = vmatprep.subr.mxu0 0.0
    %739 = vmatpush1.msra.mxu0 0.0
    %740 = vmatprep.subr.mxu0 0.0
    %741 = vmatpush1.msra.mxu0 0.0
    %742 = vmatprep.subr.mxu0 0.0
    %743 = vmatpush1.msra.mxu0 0.0
    %744 = vmatprep.subr.mxu0 0.0
    %745 = vmatpush1.msra.mxu0 0.0
    %746 = vmatprep.subr.mxu0 0.0
    %747 = vmatpush1.msra.mxu0 0.0
    %748 = vmatprep.subr.mxu0 0.0
    %749 = vmatpush1.msra.mxu0 0.0
    %750 = vmatprep.subr.mxu0 0.0
    %751 = vmatpush1.msra.mxu0 0.0
    %752 = vmatprep.subr.mxu0 0.0
    %753 = vmatpush1.msra.mxu0 0.0
    %754 = vmatprep.subr.mxu0 0.0
    %755 = vmatpush1.msra.mxu0 0.0
    %756 = vmatprep.subr.mxu0 0.0
    %757 = vmatpush1.msra.mxu0 0.0
    %758 = vmatprep.subr.mxu0 0.0
    %759 = vmatpush1.msra.mxu0 0.0
    %760 = vmatprep.subr.mxu0 0.0
    %761 = vmatpush1.msra.mxu0 0.0
    %762 = vmatprep.subr.mxu0 0.0
    %763 = vmatpush1.msra.mxu0 0.0
    %764 = vmatprep.subr.mxu0 0.0
    %765 = vmatpush1.msra.mxu0 0.0
    %766 = vmatprep.subr.mxu0 0.0
    %767 = vmatpush1.msra.mxu0 0.0
    %768 = vmatprep.mubr.f32.mxu0 0.0
    %769 = vmatmul.mubr.f32.gmra.mrb[0].mxu0 %v702
    %v770 = vpop.f32.mrb[0].mxu0
    %v771 = vadd.f32 %v697, %v770
    %v772 = vpop.f32.mrb[0].mxu0
    %773 = vdwg.mxu0
    %v774 = vmax.f32 %v771, 0.0
    %v777 = vunpack.c.l.s4 1966171168
    %v778 = vunpack.c.0.s8 %v777
    %v779 = vlaneseq
    %v780 = vshrl.u32 %v779, 7
    %v781 = vsub.s32 %v778, %v780
    %v782 = vrot.slane %v774, %v781
    %v783 = vcombine.high %v782, %v782
    %v785 = vunpack.c.l.s4 1966171168
    %v786 = vunpack.c.0.s8 %v785
    %v787 = vlaneseq
    %v788 = vshrl.u32 %v787, 7
    %v789 = vsub.s32 %v786, %v788
    %v790 = vrot.slane %v782, %v789
    %v792 = vunpack.c.l.s4 1966171168
    %v793 = vunpack.c.0.s8 %v792
    %v794 = vlaneseq
    %v795 = vshrl.u32 %v794, 7
    %v796 = vsub.s32 %v793, %v795
    %v797 = vrot.slane %v783, %v796
    %v798 = vsel %vm308, %v790, 0
    %v801 = vsel %vm308, %v682, 0
    %803 = vmatprep.subr.mxu0 0.0
    %804 = vmatpush1.xpose.msra.mxu0 %v801
    %805 = vmatprep.subr.mxu0 0.0
    %806 = vmatpush1.xpose.msra.mxu0 0.0
    %807 = vmatprep.subr.mxu0 0.0
    %808 = vmatpush1.xpose.msra.mxu0 0.0
    %809 = vmatprep.subr.mxu0 0.0
    %810 = vmatpush1.xpose.msra.mxu0 0.0
    %811 = vmatprep.subr.mxu0 0.0
    %812 = vmatpush1.xpose.msra.mxu0 0.0
    %813 = vmatprep.subr.mxu0 0.0
    %814 = vmatpush1.xpose.msra.mxu0 0.0
    %815 = vmatprep.subr.mxu0 0.0
    %816 = vmatpush1.xpose.msra.mxu0 0.0
    %817 = vmatprep.subr.mxu0 0.0
    %818 = vmatpush1.xpose.msra.mxu0 0.0
    %819 = vmatprep.subr.mxu0 0.0
    %820 = vmatpush1.xpose.msra.mxu0 0.0
    %821 = vmatprep.subr.mxu0 0.0
    %822 = vmatpush1.xpose.msra.mxu0 0.0
    %823 = vmatprep.subr.mxu0 0.0
    %824 = vmatpush1.xpose.msra.mxu0 0.0
    %825 = vmatprep.subr.mxu0 0.0
    %826 = vmatpush1.xpose.msra.mxu0 0.0
    %827 = vmatprep.subr.mxu0 0.0
    %828 = vmatpush1.xpose.msra.mxu0 0.0
    %829 = vmatprep.subr.mxu0 0.0
    %830 = vmatpush1.xpose.msra.mxu0 0.0
    %831 = vmatprep.subr.mxu0 0.0
    %832 = vmatpush1.xpose.msra.mxu0 0.0
    %833 = vmatprep.subr.mxu0 0.0
    %834 = vmatpush1.xpose.msra.mxu0 0.0
    %835 = vmatprep.subr.mxu0 0.0
    %836 = vmatpush1.xpose.msra.mxu0 0.0
    %837 = vmatprep.subr.mxu0 0.0
    %838 = vmatpush1.xpose.msra.mxu0 0.0
    %839 = vmatprep.subr.mxu0 0.0
    %840 = vmatpush1.xpose.msra.mxu0 0.0
    %841 = vmatprep.subr.mxu0 0.0
    %842 = vmatpush1.xpose.msra.mxu0 0.0
    %843 = vmatprep.subr.mxu0 0.0
    %844 = vmatpush1.xpose.msra.mxu0 0.0
    %845 = vmatprep.subr.mxu0 0.0
    %846 = vmatpush1.xpose.msra.mxu0 0.0
    %847 = vmatprep.subr.mxu0 0.0
    %848 = vmatpush1.xpose.msra.mxu0 0.0
    %849 = vmatprep.subr.mxu0 0.0
    %850 = vmatpush1.xpose.msra.mxu0 0.0
    %851 = vmatprep.subr.mxu0 0.0
    %852 = vmatpush1.xpose.msra.mxu0 0.0
    %853 = vmatprep.subr.mxu0 0.0
    %854 = vmatpush1.xpose.msra.mxu0 0.0
    %855 = vmatprep.subr.mxu0 0.0
    %856 = vmatpush1.xpose.msra.mxu0 0.0
    %857 = vmatprep.subr.mxu0 0.0
    %858 = vmatpush1.xpose.msra.mxu0 0.0
    %859 = vmatprep.subr.mxu0 0.0
    %860 = vmatpush1.xpose.msra.mxu0 0.0
    %861 = vmatprep.subr.mxu0 0.0
    %862 = vmatpush1.xpose.msra.mxu0 0.0
    %863 = vmatprep.subr.mxu0 0.0
    %864 = vmatpush1.xpose.msra.mxu0 0.0
    %865 = vmatprep.subr.mxu0 0.0
    %866 = vmatpush1.xpose.msra.mxu0 0.0
    %867 = vmatprep.mubr.f32.mxu0 0.0
    %868 = vmatmul.mubr.f32.gmra.mrb[0].mxu0 %v798
    %v869 = vpop.f32.mrb[0].mxu0
    %v870 = vadd.f32 0.0, %v869
    %v871 = vpop.f32.mrb[0].mxu0
    %872 = vdwg.mxu0
    %v873 = vsel %vm308, %v797, 0
    %v876 = vsel %vm308, %v683, 0
    %878 = vmatprep.subr.mxu0 0.0
    %879 = vmatpush1.xpose.msra.mxu0 %v876
    %880 = vmatprep.subr.mxu0 0.0
    %881 = vmatpush1.xpose.msra.mxu0 0.0
    %882 = vmatprep.subr.mxu0 0.0
    %883 = vmatpush1.xpose.msra.mxu0 0.0
    %884 = vmatprep.subr.mxu0 0.0
    %885 = vmatpush1.xpose.msra.mxu0 0.0
    %886 = vmatprep.subr.mxu0 0.0
    %887 = vmatpush1.xpose.msra.mxu0 0.0
    %888 = vmatprep.subr.mxu0 0.0
    %889 = vmatpush1.xpose.msra.mxu0 0.0
    %890 = vmatprep.subr.mxu0 0.0
    %891 = vmatpush1.xpose.msra.mxu0 0.0
    %892 = vmatprep.subr.mxu0 0.0
    %893 = vmatpush1.xpose.msra.mxu0 0.0
    %894 = vmatprep.subr.mxu0 0.0
    %895 = vmatpush1.xpose.msra.mxu0 0.0
    %896 = vmatprep.subr.mxu0 0.0
    %897 = vmatpush1.xpose.msra.mxu0 0.0
    %898 = vmatprep.subr.mxu0 0.0
    %899 = vmatpush1.xpose.msra.mxu0 0.0
    %900 = vmatprep.subr.mxu0 0.0
    %901 = vmatpush1.xpose.msra.mxu0 0.0
    %902 = vmatprep.subr.mxu0 0.0
    %903 = vmatpush1.xpose.msra.mxu0 0.0
    %904 = vmatprep.subr.mxu0 0.0
    %905 = vmatpush1.xpose.msra.mxu0 0.0
    %906 = vmatprep.subr.mxu0 0.0
    %907 = vmatpush1.xpose.msra.mxu0 0.0
    %908 = vmatprep.subr.mxu0 0.0
    %909 = vmatpush1.xpose.msra.mxu0 0.0
    %910 = vmatprep.subr.mxu0 0.0
    %911 = vmatpush1.xpose.msra.mxu0 0.0
    %912 = vmatprep.subr.mxu0 0.0
    %913 = vmatpush1.xpose.msra.mxu0 0.0
    %914 = vmatprep.subr.mxu0 0.0
    %915 = vmatpush1.xpose.msra.mxu0 0.0
    %916 = vmatprep.subr.mxu0 0.0
    %917 = vmatpush1.xpose.msra.mxu0 0.0
    %918 = vmatprep.subr.mxu0 0.0
    %919 = vmatpush1.xpose.msra.mxu0 0.0
    %920 = vmatprep.subr.mxu0 0.0
    %921 = vmatpush1.xpose.msra.mxu0 0.0
    %922 = vmatprep.subr.mxu0 0.0
    %923 = vmatpush1.xpose.msra.mxu0 0.0
    %924 = vmatprep.subr.mxu0 0.0
    %925 = vmatpush1.xpose.msra.mxu0 0.0
    %926 = vmatprep.subr.mxu0 0.0
    %927 = vmatpush1.xpose.msra.mxu0 0.0
    %928 = vmatprep.subr.mxu0 0.0
    %929 = vmatpush1.xpose.msra.mxu0 0.0
    %930 = vmatprep.subr.mxu0 0.0
    %931 = vmatpush1.xpose.msra.mxu0 0.0
    %932 = vmatprep.subr.mxu0 0.0
    %933 = vmatpush1.xpose.msra.mxu0 0.0
    %934 = vmatprep.subr.mxu0 0.0
    %935 = vmatpush1.xpose.msra.mxu0 0.0
    %936 = vmatprep.subr.mxu0 0.0
    %937 = vmatpush1.xpose.msra.mxu0 0.0
    %938 = vmatprep.subr.mxu0 0.0
    %939 = vmatpush1.xpose.msra.mxu0 0.0
    %940 = vmatprep.subr.mxu0 0.0
    %941 = vmatpush1.xpose.msra.mxu0 0.0
    %942 = vmatprep.mubr.f32.mxu0 0.0
    %943 = vmatmul.mubr.f32.gmra.mrb[0].mxu0 %v873
    %v944 = vpop.f32.mrb[0].mxu0
    %v945 = vadd.f32 0.0, %v944
    %v946 = vpop.f32.mrb[0].mxu0
    %947 = vdwg.mxu0
    %v948 = vld [vmem:[%s1] sm:$0xff]
    %v949 = vld [vmem:[%s1 + $0x8] sm:$0xff]
    %v952 = vrot.slane %v948, 1
    %v953 = vrot.slane %v949, 1
    %v956 = vmul.f32 %v870, %v952
    %v957 = vmul.f32 %v945, %v953
    %v958 = vmax.f32 %v956, 0.0
    %v959 = vmax.f32 %v957, 0.0
    %v960 = vmin.f32 %v958, 9e+13
    %v961 = vmin.f32 %v959, 9e+13
    %v962 = vsub.f32 1.0, %v948
    %v963 = vsub.f32 1.0, %v949
    %v964 = vmul.f32 %v962, 9e+15
    %v965 = vmul.f32 %v963, 9e+15
    %v968 = vrot.slane %v964, 1
    %v969 = vrot.slane %v965, 1
    %v972 = vsub.f32 %v960, %v968
    %v973 = vsub.f32 %v961, %v969
    %vm974 = vcmask 57344
    %v975 = vsel %vm974, %v972, -inf
    %976 = vmax.xlane.f32.xlu0 %v975
    %v977 = vpop.xlane.xlu0 %976
    %v978 = vsel %vm974, %v973, -inf
    %979 = vmax.xlane.f32.xlu0 %v978
    %v980 = vpop.xlane.xlu0 %979
    %v981 = vsub.f32 %v972, %v977
    %v982 = vsub.f32 %v973, %v980
    %v983 = vmul.f32 %v981, 1.442695
    %v984 = vpow.pop %v983
    %v985 = vmul.f32 %v982, 1.442695
    %v986 = vpow.pop %v985
    %v987 = vsel %vm974, %v984, 0.0
    %988 = vadd.xlane.f32.xlu0 %v987
    %v989 = vpop.xlane.xlu0 %988
    %v990 = vsel %vm974, %v986, 0.0
    %991 = vadd.xlane.f32.xlu0 %v990
    %v992 = vpop.xlane.xlu0 %991
    %v993 = vrcp.pop %v989
    %v994 = vrcp.pop %v992
    %v995 = vmul.f32 %v984, %v993
    %v996 = vmul.f32 %v986, %v994
    %vm997 = vcmask 64512
    %v999 = vsel %vm997, %v995, 0
    %1001 = vmatprep.subr.mxu0 0.0
    %1002 = vmatpush1.msra.mxu0 %v590
    %1003 = vmatprep.subr.mxu0 0.0
    %1004 = vmatpush1.msra.mxu0 0.0
    %1005 = vmatprep.subr.mxu0 0.0
    %1006 = vmatpush1.msra.mxu0 0.0
    %1007 = vmatprep.subr.mxu0 0.0
    %1008 = vmatpush1.msra.mxu0 0.0
    %1009 = vmatprep.subr.mxu0 0.0
    %1010 = vmatpush1.msra.mxu0 0.0
    %1011 = vmatprep.subr.mxu0 0.0
    %1012 = vmatpush1.msra.mxu0 0.0
    %1013 = vmatprep.subr.mxu0 0.0
    %1014 = vmatpush1.msra.mxu0 0.0
    %1015 = vmatprep.subr.mxu0 0.0
    %1016 = vmatpush1.msra.mxu0 0.0
    %1017 = vmatprep.subr.mxu0 0.0
    %1018 = vmatpush1.msra.mxu0 0.0
    %1019 = vmatprep.subr.mxu0 0.0
    %1020 = vmatpush1.msra.mxu0 0.0
    %1021 = vmatprep.subr.mxu0 0.0
    %1022 = vmatpush1.msra.mxu0 0.0
    %1023 = vmatprep.subr.mxu0 0.0
    %1024 = vmatpush1.msra.mxu0 0.0
    %1025 = vmatprep.subr.mxu0 0.0
    %1026 = vmatpush1.msra.mxu0 0.0
    %1027 = vmatprep.subr.mxu0 0.0
    %1028 = vmatpush1.msra.mxu0 0.0
    %1029 = vmatprep.subr.mxu0 0.0
    %1030 = vmatpush1.msra.mxu0 0.0
    %1031 = vmatprep.subr.mxu0 0.0
    %1032 = vmatpush1.msra.mxu0 0.0
    %1033 = vmatprep.subr.mxu0 0.0
    %1034 = vmatpush1.msra.mxu0 0.0
    %1035 = vmatprep.subr.mxu0 0.0
    %1036 = vmatpush1.msra.mxu0 0.0
    %1037 = vmatprep.subr.mxu0 0.0
    %1038 = vmatpush1.msra.mxu0 0.0
    %1039 = vmatprep.subr.mxu0 0.0
    %1040 = vmatpush1.msra.mxu0 0.0
    %1041 = vmatprep.subr.mxu0 0.0
    %1042 = vmatpush1.msra.mxu0 0.0
    %1043 = vmatprep.subr.mxu0 0.0
    %1044 = vmatpush1.msra.mxu0 0.0
    %1045 = vmatprep.subr.mxu0 0.0
    %1046 = vmatpush1.msra.mxu0 0.0
    %1047 = vmatprep.subr.mxu0 0.0
    %1048 = vmatpush1.msra.mxu0 0.0
    %1049 = vmatprep.subr.mxu0 0.0
    %1050 = vmatpush1.msra.mxu0 0.0
    %1051 = vmatprep.subr.mxu0 0.0
    %1052 = vmatpush1.msra.mxu0 0.0
    %1053 = vmatprep.subr.mxu0 0.0
    %1054 = vmatpush1.msra.mxu0 0.0
    %1055 = vmatprep.subr.mxu0 0.0
    %1056 = vmatpush1.msra.mxu0 0.0
    %1057 = vmatprep.subr.mxu0 0.0
    %1058 = vmatpush1.msra.mxu0 0.0
    %1059 = vmatprep.subr.mxu0 0.0
    %1060 = vmatpush1.msra.mxu0 0.0
    %1061 = vmatprep.subr.mxu0 0.0
    %1062 = vmatpush1.msra.mxu0 0.0
    %1063 = vmatprep.subr.mxu0 0.0
    %1064 = vmatpush1.msra.mxu0 0.0
    %1065 = vmatprep.mubr.f32.mxu0 0.0
    %1066 = vmatmul.mubr.f32.gmra.mrb[0].mxu0 %v999
    %v1067 = vpop.f32.mrb[0].mxu0
    %v1068 = vadd.f32 0.0, %v1067
    %v1069 = vpop.f32.mrb[0].mxu0
    %1070 = vdwg.mxu0
    %v1072 = vsel %vm997, %v996, 0
    %1074 = vmatprep.subr.mxu0 0.0
    %1075 = vmatpush1.msra.mxu0 %v591
    %1076 = vmatprep.subr.mxu0 0.0
    %1077 = vmatpush1.msra.mxu0 0.0
    %1078 = vmatprep.subr.mxu0 0.0
    %1079 = vmatpush1.msra.mxu0 0.0
    %1080 = vmatprep.subr.mxu0 0.0
    %1081 = vmatpush1.msra.mxu0 0.0
    %1082 = vmatprep.subr.mxu0 0.0
    %1083 = vmatpush1.msra.mxu0 0.0
    %1084 = vmatprep.subr.mxu0 0.0
    %1085 = vmatpush1.msra.mxu0 0.0
    %1086 = vmatprep.subr.mxu0 0.0
    %1087 = vmatpush1.msra.mxu0 0.0
    %1088 = vmatprep.subr.mxu0 0.0
    %1089 = vmatpush1.msra.mxu0 0.0
    %1090 = vmatprep.subr.mxu0 0.0
    %1091 = vmatpush1.msra.mxu0 0.0
    %1092 = vmatprep.subr.mxu0 0.0
    %1093 = vmatpush1.msra.mxu0 0.0
    %1094 = vmatprep.subr.mxu0 0.0
    %1095 = vmatpush1.msra.mxu0 0.0
    %1096 = vmatprep.subr.mxu0 0.0
    %1097 = vmatpush1.msra.mxu0 0.0
    %1098 = vmatprep.subr.mxu0 0.0
    %1099 = vmatpush1.msra.mxu0 0.0
    %1100 = vmatprep.subr.mxu0 0.0
    %1101 = vmatpush1.msra.mxu0 0.0
    %1102 = vmatprep.subr.mxu0 0.0
    %1103 = vmatpush1.msra.mxu0 0.0
    %1104 = vmatprep.subr.mxu0 0.0
    %1105 = vmatpush1.msra.mxu0 0.0
    %1106 = vmatprep.subr.mxu0 0.0
    %1107 = vmatpush1.msra.mxu0 0.0
    %1108 = vmatprep.subr.mxu0 0.0
    %1109 = vmatpush1.msra.mxu0 0.0
    %1110 = vmatprep.subr.mxu0 0.0
    %1111 = vmatpush1.msra.mxu0 0.0
    %1112 = vmatprep.subr.mxu0 0.0
    %1113 = vmatpush1.msra.mxu0 0.0
    %1114 = vmatprep.subr.mxu0 0.0
    %1115 = vmatpush1.msra.mxu0 0.0
    %1116 = vmatprep.subr.mxu0 0.0
    %1117 = vmatpush1.msra.mxu0 0.0
    %1118 = vmatprep.subr.mxu0 0.0
    %1119 = vmatpush1.msra.mxu0 0.0
    %1120 = vmatprep.subr.mxu0 0.0
    %1121 = vmatpush1.msra.mxu0 0.0
    %1122 = vmatprep.subr.mxu0 0.0
    %1123 = vmatpush1.msra.mxu0 0.0
    %1124 = vmatprep.subr.mxu0 0.0
    %1125 = vmatpush1.msra.mxu0 0.0
    %1126 = vmatprep.subr.mxu0 0.0
    %1127 = vmatpush1.msra.mxu0 0.0
    %1128 = vmatprep.subr.mxu0 0.0
    %1129 = vmatpush1.msra.mxu0 0.0
    %1130 = vmatprep.subr.mxu0 0.0
    %1131 = vmatpush1.msra.mxu0 0.0
    %1132 = vmatprep.subr.mxu0 0.0
    %1133 = vmatpush1.msra.mxu0 0.0
    %1134 = vmatprep.subr.mxu0 0.0
    %1135 = vmatpush1.msra.mxu0 0.0
    %1136 = vmatprep.subr.mxu0 0.0
    %1137 = vmatpush1.msra.mxu0 0.0
    %1138 = vmatprep.mubr.f32.mxu0 0.0
    %1139 = vmatmul.mubr.f32.gmra.mrb[0].mxu0 %v1072
    %v1140 = vpop.f32.mrb[0].mxu0
    %v1141 = vadd.f32 0.0, %v1140
    %v1142 = vpop.f32.mrb[0].mxu0
    %1143 = vdwg.mxu0
    %v1144 = vld [vmem:[%s18] sm:$0xff]
    %v1145 = vld [vmem:[%s18 + $0x8] sm:$0xff]
    %v1146 = vld [vmem:[%s18 + $0x10] sm:$0xff]
    %v1147 = vld [vmem:[%s18 + $0x18] sm:$0xff]
    %v1148 = vld [vmem:[%s18 + $0x20] sm:$0xff]
    %v1149 = vld [vmem:[%s18 + $0x28] sm:$0xff]
    %v1150 = vld [vmem:[%s18 + $0x30] sm:$0xff]
    %v1151 = vld [vmem:[%s18 + $0x38] sm:$0xff]
    %v1152 = vld [vmem:[%s18 + $0x40] sm:$0xff]
    %v1153 = vld [vmem:[%s18 + $0x48] sm:$0xff]
    %v1154 = vld [vmem:[%s18 + $0x50] sm:$0xff]
    %v1155 = vld [vmem:[%s18 + $0x58] sm:$0xff]
    %v1156 = vld [vmem:[%s18 + $0x60] sm:$0xff]
    %v1157 = vld [vmem:[%s18 + $0x68] sm:$0xff]
    %v1158 = vld [vmem:[%s18 + $0x70] sm:$0xff]
    %v1159 = vld [vmem:[%s18 + $0x78] sm:$0xff]
    %v1162 = vrot.slane %v1141, 7
    %v1163 = vsel %vm700, %v1162, %v1068
    %v1164 = vsel %vm308, %v1163, 0
    %1166 = vmatprep.subr.mxu0 0.0
    %1167 = vmatpush1.msra.mxu0 %v1152
    %1168 = vmatprep.subr.mxu0 0.0
    %1169 = vmatpush1.msra.mxu0 %v1153
    %1170 = vmatprep.subr.mxu0 0.0
    %1171 = vmatpush1.msra.mxu0 %v1154
    %1172 = vmatprep.subr.mxu0 0.0
    %1173 = vmatpush1.msra.mxu0 %v1155
    %1174 = vmatprep.subr.mxu0 0.0
    %1175 = vmatpush1.msra.mxu0 %v1156
    %1176 = vmatprep.subr.mxu0 0.0
    %1177 = vmatpush1.msra.mxu0 %v1157
    %1178 = vmatprep.subr.mxu0 0.0
    %1179 = vmatpush1.msra.mxu0 %v1158
    %1180 = vmatprep.subr.mxu0 0.0
    %1181 = vmatpush1.msra.mxu0 %v1159
    %1182 = vmatprep.subr.mxu0 0.0
    %1183 = vmatpush1.msra.mxu0 0.0
    %1184 = vmatprep.subr.mxu0 0.0
    %1185 = vmatpush1.msra.mxu0 0.0
    %1186 = vmatprep.subr.mxu0 0.0
    %1187 = vmatpush1.msra.mxu0 0.0
    %1188 = vmatprep.subr.mxu0 0.0
    %1189 = vmatpush1.msra.mxu0 0.0
    %1190 = vmatprep.subr.mxu0 0.0
    %1191 = vmatpush1.msra.mxu0 0.0
    %1192 = vmatprep.subr.mxu0 0.0
    %1193 = vmatpush1.msra.mxu0 0.0
    %1194 = vmatprep.subr.mxu0 0.0
    %1195 = vmatpush1.msra.mxu0 0.0
    %1196 = vmatprep.subr.mxu0 0.0
    %1197 = vmatpush1.msra.mxu0 0.0
    %1198 = vmatprep.subr.mxu0 0.0
    %1199 = vmatpush1.msra.mxu0 0.0
    %1200 = vmatprep.subr.mxu0 0.0
    %1201 = vmatpush1.msra.mxu0 0.0
    %1202 = vmatprep.subr.mxu0 0.0
    %1203 = vmatpush1.msra.mxu0 0.0
    %1204 = vmatprep.subr.mxu0 0.0
    %1205 = vmatpush1.msra.mxu0 0.0
    %1206 = vmatprep.subr.mxu0 0.0
    %1207 = vmatpush1.msra.mxu0 0.0
    %1208 = vmatprep.subr.mxu0 0.0
    %1209 = vmatpush1.msra.mxu0 0.0
    %1210 = vmatprep.subr.mxu0 0.0
    %1211 = vmatpush1.msra.mxu0 0.0
    %1212 = vmatprep.subr.mxu0 0.0
    %1213 = vmatpush1.msra.mxu0 0.0
    %1214 = vmatprep.subr.mxu0 0.0
    %1215 = vmatpush1.msra.mxu0 0.0
    %1216 = vmatprep.subr.mxu0 0.0
    %1217 = vmatpush1.msra.mxu0 0.0
    %1218 = vmatprep.subr.mxu0 0.0
    %1219 = vmatpush1.msra.mxu0 0.0
    %1220 = vmatprep.subr.mxu0 0.0
    %1221 = vmatpush1.msra.mxu0 0.0
    %1222 = vmatprep.subr.mxu0 0.0
    %1223 = vmatpush1.msra.mxu0 0.0
    %1224 = vmatprep.subr.mxu0 0.0
    %1225 = vmatpush1.msra.mxu0 0.0
    %1226 = vmatprep.subr.mxu0 0.0
    %1227 = vmatpush1.msra.mxu0 0.0
    %1228 = vmatprep.subr.mxu0 0.0
    %1229 = vmatpush1.msra.mxu0 0.0
    %1230 = vmatprep.mubr.f32.mxu0 0.0
    %1231 = vmatmul.mubr.f32.gmra.mrb[0].mxu0 %v1164
    %v1232 = vpop.f32.mrb[0].mxu0
    %v1233 = vadd.f32 0.0, %v1232
    %v1234 = vpop.f32.mrb[0].mxu0
    %1235 = vdwg.mxu0
    %1236 = vmatprep.subr.mxu0 0.0
    %1237 = vmatpush1.msra.mxu0 %v1144
    %1238 = vmatprep.subr.mxu0 0.0
    %1239 = vmatpush1.msra.mxu0 %v1145
    %1240 = vmatprep.subr.mxu0 0.0
    %1241 = vmatpush1.msra.mxu0 %v1146
    %1242 = vmatprep.subr.mxu0 0.0
    %1243 = vmatpush1.msra.mxu0 %v1147
    %1244 = vmatprep.subr.mxu0 0.0
    %1245 = vmatpush1.msra.mxu0 %v1148
    %1246 = vmatprep.subr.mxu0 0.0
    %1247 = vmatpush1.msra.mxu0 %v1149
    %1248 = vmatprep.subr.mxu0 0.0
    %1249 = vmatpush1.msra.mxu0 %v1150
    %1250 = vmatprep.subr.mxu0 0.0
    %1251 = vmatpush1.msra.mxu0 %v1151
    %1252 = vmatprep.subr.mxu0 0.0
    %1253 = vmatpush1.msra.mxu0 0.0
    %1254 = vmatprep.subr.mxu0 0.0
    %1255 = vmatpush1.msra.mxu0 0.0
    %1256 = vmatprep.subr.mxu0 0.0
    %1257 = vmatpush1.msra.mxu0 0.0
    %1258 = vmatprep.subr.mxu0 0.0
    %1259 = vmatpush1.msra.mxu0 0.0
    %1260 = vmatprep.subr.mxu0 0.0
    %1261 = vmatpush1.msra.mxu0 0.0
    %1262 = vmatprep.subr.mxu0 0.0
    %1263 = vmatpush1.msra.mxu0 0.0
    %1264 = vmatprep.subr.mxu0 0.0
    %1265 = vmatpush1.msra.mxu0 0.0
    %1266 = vmatprep.subr.mxu0 0.0
    %1267 = vmatpush1.msra.mxu0 0.0
    %1268 = vmatprep.subr.mxu0 0.0
    %1269 = vmatpush1.msra.mxu0 0.0
    %1270 = vmatprep.subr.mxu0 0.0
    %1271 = vmatpush1.msra.mxu0 0.0
    %1272 = vmatprep.subr.mxu0 0.0
    %1273 = vmatpush1.msra.mxu0 0.0
    %1274 = vmatprep.subr.mxu0 0.0
    %1275 = vmatpush1.msra.mxu0 0.0
    %1276 = vmatprep.subr.mxu0 0.0
    %1277 = vmatpush1.msra.mxu0 0.0
    %1278 = vmatprep.subr.mxu0 0.0
    %1279 = vmatpush1.msra.mxu0 0.0
    %1280 = vmatprep.subr.mxu0 0.0
    %1281 = vmatpush1.msra.mxu0 0.0
    %1282 = vmatprep.subr.mxu0 0.0
    %1283 = vmatpush1.msra.mxu0 0.0
    %1284 = vmatprep.subr.mxu0 0.0
    %1285 = vmatpush1.msra.mxu0 0.0
    %1286 = vmatprep.subr.mxu0 0.0
    %1287 = vmatpush1.msra.mxu0 0.0
    %1288 = vmatprep.subr.mxu0 0.0
    %1289 = vmatpush1.msra.mxu0 0.0
    %1290 = vmatprep.subr.mxu0 0.0
    %1291 = vmatpush1.msra.mxu0 0.0
    %1292 = vmatprep.subr.mxu0 0.0
    %1293 = vmatpush1.msra.mxu0 0.0
    %1294 = vmatprep.subr.mxu0 0.0
    %1295 = vmatpush1.msra.mxu0 0.0
    %1296 = vmatprep.subr.mxu0 0.0
    %1297 = vmatpush1.msra.mxu0 0.0
    %1298 = vmatprep.subr.mxu0 0.0
    %1299 = vmatpush1.msra.mxu0 0.0
    %1300 = vmatprep.mubr.f32.mxu0 0.0
    %1301 = vmatmul.mubr.f32.gmra.mrb[0].mxu0 %v702
    %v1302 = vpop.f32.mrb[0].mxu0
    %v1303 = vadd.f32 %v1233, %v1302
    %v1304 = vpop.f32.mrb[0].mxu0
    %1305 = vdwg.mxu0
    %v1306 = vld [vmem:[%s19] sm:$0x1]
    %v1308 = vlaneseq
    %v1309 = vshrl.u32 %v1308, 7
    %v1310 = vsub.s32 0, %v1309
    %v1311 = vrot.slane %v1306, %v1310
    %v1313 = vadd.f32 %v1303, %v1311
    %vm1314 = vcmask 33792
    %v1315 = vsel %vm1314, %v1313, -inf
    %1316 = vmax.xlane.f32.xlu0 %v1315
    %v1317 = vpop.xlane.xlu0 %1316
    %v1318 = vlaneseq
    %v1319 = vand.u32 %v1318, 127
    %v1320 = vcvt.s32.f32 %v1319
    %vm1321 = vcmp.ge.f32.partialorder %v1313, %v1317
    %v1322 = vsub.f32 0.0, %v1320
    %v1323 = vsel %vm1321, %v1322, -5.0
    %v1324 = vsel %vm1314, %v1323, -inf
    %1325 = vmax.xlane.f32.xlu0 %v1324
    %v1326 = vpop.xlane.xlu0 %1325
    %v1327 = vsub.f32 0.0, %v1326
    %v1328 = vcvt.f32.s32.to.zero.pseudo %v1327
    %v1329 = vsub.f32 %v1313, %v1317
    %v1330 = vmul.f32 %v1329, 1.442695
    %v1331 = vpow.pop %v1330
    %v1332 = vsel %vm1314, %v1331, 0.0
    %1333 = vadd.xlane.f32.xlu0 %v1332
    %v1334 = vpop.xlane.xlu0 %1333
    %v1335 = vlog2.pop %v1334
    %v1336 = vmul.f32 %v1335, 0.6931472
    %v1337 = vadd.f32 %v1317, %v1336
    %vm1338 = vcmask 1024
    %1339 = vst.msk [vmem:[%s20] sm:$0x3] %vm1338, %v1328
    %v1340 = vsub.f32 %v1317, %v1337
    %1341 = vst.msk [vmem:[%s21] sm:$0x3] %vm1338, %v1340
    // Predicated region
    $region114: #{rdgn_actor_forward.1} parent=1 // pred_check
      _
    $region115: #{rdgn_actor_forward.1} parent=1 // pred_check_branch
      %1343 = sbr.rel (0) target = $region117
    $region116: #{rdgn_actor_forward.1} parent=1 // pred_region
      _
    $region117: #{rdgn_actor_forward.1} parent=1 // pred_fallthru
      _
    // Predicated region
    $region118: #{rdgn_actor_forward.1} parent=1 // pred_check
      _
    $region119: #{rdgn_actor_forward.1} parent=1 // pred_check_branch
      %1345 = sbr.rel (0) target = $region121
    $region120: #{rdgn_actor_forward.1} parent=1 // pred_region
      _
    $region121: #{rdgn_actor_forward.1} parent=1 // pred_fallthru
      _
    // Predicated region
    $region122: #{rdgn_actor_forward.1} parent=1 // pred_check
      _
    $region123: #{rdgn_actor_forward.1} parent=1 // pred_check_branch
      %1347 = sbr.rel (0) target = $region125
    $region124: #{rdgn_actor_forward.1} parent=1 // pred_region
      _
    $region125: #{rdgn_actor_forward.1} parent=1 // pred_fallthru
      _
    // Predicated region
    $region126: #{rdgn_actor_forward.1} parent=1 // pred_check
      _
    $region127: #{rdgn_actor_forward.1} parent=1 // pred_check_branch
      %1349 = sbr.rel (0) target = $region129
    $region128: #{rdgn_actor_forward.1} parent=1 // pred_region
      _
    $region129: #{rdgn_actor_forward.1} parent=1 // pred_fallthru
      _
    %1350 = vsyncpa [#allocation3], 1
    %1351 = vsyncpa [#allocation5], 1
    %1352 = vsyncpa [#allocation8], 1
    %1353 = vsyncpa [#allocation11], 1
    %1354 = vsyncpa [#allocation14], 1

</llo_original>
